<compile_context>
chip_gen: v7x
topology: tpu7x:2x2x1
jax: 0.10.0
libtpu: 0.0.40
codegen_flags: <defaults>
</compile_context>

<pallas_src>
import jax
import jax.numpy as jnp
from jax import lax
from jax.experimental import pallas as pl
from jax.experimental.pallas import tpu as pltpu


def _make_dwconv_kernel(H, W, TH, ragged, use_roll):
    """Builds the kernel body for one static tiling configuration."""

    def kernel(xm_ref, xt_ref, xb_ref, w_ref, b_ref, o_ref):
        # xm_ref : (1, TH, W, C) image rows [h*TH, h*TH+TH)   (may overrun H on the
        #          last tile; overrun rows are zeroed below when `ragged`)
        # xt_ref : (1, 1,  W, C) row max(h*TH-1, 0)           (top halo)
        # xb_ref : (1, 1,  W, C) row min(h*TH+TH, H-1)        (bottom halo)
        # w_ref  : (9, C) depthwise taps, k = kh*3 + kw
        # b_ref  : (1, C) bias
        # o_ref  : (1, TH, W, C)
        C = o_ref.shape[3]
        h = pl.program_id(1)
        row0 = h * TH                          # global row index of this tile's first row

        w = w_ref[...].astype(jnp.float32)     # (9, C)  loaded & cast once per grid step
        wt = [w[k] for k in range(9)]          # nine (C,) per-channel tap vectors (hoisted)
        bias = b_ref[0].astype(jnp.float32)    # (C,)

        if use_roll:
            col = lax.broadcasted_iota(jnp.int32, (W, 1), 0)
            mask_l = col >= 1                  # zero the wrapped column of the left tap
            mask_r = col <= W - 2              # zero the wrapped column of the right tap

        def shift_right(row):
            # result[x] = row[x-1], result[0] = 0  (input column x-1, zero padding)
            if use_roll:
                return jnp.where(mask_l, pltpu.roll(row, shift=1, axis=0), 0.0)
            zero = jnp.zeros((1, C), jnp.float32)
            return jnp.concatenate([zero, row[:-1]], axis=0)

        def shift_left(row):
            # result[x] = row[x+1], result[W-1] = 0  (input column x+1, zero padding)
            if use_roll:
                return jnp.where(mask_r, pltpu.roll(row, shift=W - 1, axis=0), 0.0)
            zero = jnp.zeros((1, C), jnp.float32)
            return jnp.concatenate([row[1:], zero], axis=0)

        def load_main(i):                      # i is a static Python int
            v = xm_ref[0, i].astype(jnp.float32)          # (W, C)
            if ragged:                         # zero rows past the bottom of the image
                v = jnp.where(row0 + i < H, v, 0.0)
            return v

        def row_taps(row, kh):
            # three horizontal taps of kernel-row kh applied to one input row
            wl, wc, wr = wt[3 * kh + 0], wt[3 * kh + 1], wt[3 * kh + 2]
            return row * wc + shift_right(row) * wl + shift_left(row) * wr

        # Halo rows, zeroed when they lie outside the image (== zero padding).
        top = jnp.where(row0 > 0, xt_ref[0, 0].astype(jnp.float32), 0.0)
        bot = jnp.where(row0 + TH < H, xb_ref[0, 0].astype(jnp.float32), 0.0)

        # Strip-wise accumulation with a 3-row rolling window carried in registers.
        prev = top
        cur = load_main(0)
        for oh in range(TH):                   # TH is static -> fully unrolled
            nxt = load_main(oh + 1) if oh + 1 < TH else bot
            acc = bias + row_taps(cur, 1)      # bias folded into first term (no memset)
            acc = acc + row_taps(prev, 0)
            acc = acc + row_taps(nxt, 2)
            o_ref[0, oh] = acc.astype(o_ref.dtype)
            prev, cur = cur, nxt

    return kernel


def dwconv(x, H, W, weight, bias, *, tile_h_max=32):
    """x: (B, N, C) with N == H*W.  weight: (C, 3, 3).  bias: (C,).  Returns (B, N, C).

    Equivalent to nn.Conv2d(C, C, 3, 1, 1, groups=C, bias=True) applied to
    x.transpose(1, 2).view(B, C, H, W), flattened back to (B, N, C).
    """
    B, N, C = x.shape
    assert N == H * W, "sequence length must equal H*W"

    x_img = x.reshape(B, H, W, C)              # NHWC view, channels -> lanes (free reshape)
    w_taps = weight.reshape(C, 9).T            # (9, C), tap k = kh*3 + kw
    b_row = bias.reshape(1, C)

    # ---- row-tile size selection --------------------------------------------------
    # Keep ~2x(in block) + 2x(out block) comfortably below the 32 MiB scoped-VMEM
    # default (also safe on v7x, which has only 64 MiB physical VMEM).
    bytes_per_row = W * C * max(x.dtype.itemsize, 4)
    th_cap = max(1, (16 * 1024 * 1024) // (4 * bytes_per_row))
    th_max = max(1, min(tile_h_max, th_cap, H))
    TH = 1
    for t in range(th_max, 0, -1):             # largest divisor of H <= th_max
        if H % t == 0:
            TH = t
            break
    if TH < max(1, th_max // 2):               # avoid the TH=1 cliff for odd/prime H:
        TH = th_max                            # cdiv grid + masked partial last tile instead
    nH = pl.cdiv(H, TH)
    ragged = (H % TH) != 0

    use_roll = (W % 8 == 0) and W >= 8         # sublane roll on the XLU; else safe slice path
    kernel = _make_dwconv_kernel(H, W, TH, ragged, use_roll)

    out = pl.pallas_call(
        kernel,
        out_shape=jax.ShapeDtypeStruct((B, H, W, C), x.dtype),
        grid_spec=pltpu.PrefetchScalarGridSpec(
            num_scalar_prefetch=0,
            grid=(B, nH),
            in_specs=[
                # main TH rows of this tile
                pl.BlockSpec((1, TH, W, C), lambda b, h: (b, h, 0, 0)),
                # one halo row above / below the tile; index is clamped into range and
                # the kernel zeroes its contribution when the row is outside the image
                pl.BlockSpec((1, 1, W, C),
                             lambda b, h: (b, jnp.maximum(h * TH - 1, 0), 0, 0)),
                pl.BlockSpec((1, 1, W, C),
                             lambda b, h: (b, jnp.minimum(h * TH + TH, H - 1), 0, 0)),
                pl.BlockSpec((9, C), lambda b, h: (0, 0)),
                pl.BlockSpec((1, C), lambda b, h: (0, 0)),
            ],
            out_specs=pl.BlockSpec((1, TH, W, C), lambda b, h: (b, h, 0, 0)),
        ),
        compiler_params=pltpu.CompilerParams(
            dimension_semantics=("parallel", "parallel")),
    )(x_img, x_img, x_img, w_taps, b_row)

    return out.reshape(B, N, C)


def _reference(x, H, W, weight, bias):
    """Exact f32 reference matching PyTorch Conv2d(C, C, 3, 1, 1, groups=C, bias=True)."""
    B, N, C = x.shape
    img = x.reshape(B, H, W, C).astype(jnp.float32)
    pad = jnp.pad(img, ((0, 0), (1, 1), (1, 1), (0, 0)))
    out = jnp.zeros((B, H, W, C), jnp.float32)
    for kh in range(3):
        for kw in range(3):
            out = out + pad[:, kh:kh + H, kw:kw + W, :] * weight[:, kh, kw].astype(jnp.float32)
    out = out + bias.astype(jnp.float32)
    return out.astype(x.dtype).reshape(B, N, C)


if __name__ == "__main__":
    key = jax.random.PRNGKey(0)
    kx, kw_, kb = jax.random.split(key, 3)

    # Small MiT-stage-1-like shape; tile_h_max=8 -> 2 row tiles per image so the
    # halo path is exercised.
    B, C, Hsz, Wsz = 2, 64, 16, 16
    N = Hsz * Wsz
    x = jax.random.normal(kx, (B, N, C), dtype=jnp.float32)
    weight = jax.random.normal(kw_, (C, 3, 3), dtype=jnp.float32) * 0.1
    bias = jax.random.normal(kb, (C,), dtype=jnp.float32) * 0.1

    out = dwconv(x, Hsz, Wsz, weight, bias, tile_h_max=8)
    out = jax.block_until_ready(out)
    ref = _reference(x, Hsz, Wsz, weight, bias)
    assert out.shape == (B, N, C)
    assert jnp.allclose(out, ref, atol=1e-4, rtol=1e-4), "mismatch vs reference (even H)"

    # Odd H -> cdiv grid with a masked partial last tile (robustness path).
    H2, W2 = 7, 16
    x2 = jax.random.normal(kx, (1, H2 * W2, C), dtype=jnp.float32)
    out2 = dwconv(x2, H2, W2, weight, bias, tile_h_max=4)
    out2 = jax.block_until_ready(out2)
    ref2 = _reference(x2, H2, W2, weight, bias)
    assert jnp.allclose(out2, ref2, atol=1e-4, rtol=1e-4), "mismatch vs reference (ragged H)"

    print("KERNEL_OK")
</pallas_src>

<mosaic_0001>
module attributes {stable_mosaic.version = 11 : i64} {
  func.func @kernel(%arg0: i32, %arg1: i32, %arg2: memref<1x8x16x64xf32, #tpu.memory_space<vmem>>, %arg3: memref<1x1x16x64xf32, #tpu.memory_space<vmem>>, %arg4: memref<1x1x16x64xf32, #tpu.memory_space<vmem>>, %arg5: memref<9x64xf32, #tpu.memory_space<vmem>>, %arg6: memref<1x64xf32, #tpu.memory_space<vmem>>, %arg7: memref<1x8x16x64xf32, #tpu.memory_space<vmem>>) attributes {dimension_semantics = [#tpu.dimension_semantics<parallel>, #tpu.dimension_semantics<parallel>], iteration_bounds = array<i64: 2, 2>, scalar_prefetch = 0 : i64, scratch_operands = 0 : i64, tpu.core_type = #tpu.core_type<tc>, window_params = [{transform_indices = @transform_0, window_bounds = array<i64: 1, 8, 16, 64>}, {transform_indices = @transform_1, window_bounds = array<i64: 1, 1, 16, 64>}, {transform_indices = @transform_2, window_bounds = array<i64: 1, 1, 16, 64>}, {pipeline_mode = #tpu.pipeline_mode<synchronous>, transform_indices = @transform_3, window_bounds = array<i64: 9, 64>}, {pipeline_mode = #tpu.pipeline_mode<synchronous>, transform_indices = @transform_4, window_bounds = array<i64: 1, 64>}, {transform_indices = @transform_5, window_bounds = array<i64: 1, 8, 16, 64>}]} {
    %c8_i32 = arith.constant 8 : i32
    %0 = arith.muli %arg1, %c8_i32 : i32
    %c0 = arith.constant 0 : index
    %c0_0 = arith.constant 0 : index
    %1 = vector.load %arg5[%c0, %c0_0] : memref<9x64xf32, #tpu.memory_space<vmem>>, vector<9x64xf32>
    %2 = vector.extract_strided_slice %1 {offsets = [0, 0], sizes = [1, 64], strides = [1, 1]} : vector<9x64xf32> to vector<1x64xf32>
    %3 = vector.shape_cast %2 : vector<1x64xf32> to vector<64xf32>
    %4 = vector.extract_strided_slice %1 {offsets = [1, 0], sizes = [1, 64], strides = [1, 1]} : vector<9x64xf32> to vector<1x64xf32>
    %5 = vector.shape_cast %4 : vector<1x64xf32> to vector<64xf32>
    %6 = vector.extract_strided_slice %1 {offsets = [2, 0], sizes = [1, 64], strides = [1, 1]} : vector<9x64xf32> to vector<1x64xf32>
    %7 = vector.shape_cast %6 : vector<1x64xf32> to vector<64xf32>
    %8 = vector.extract_strided_slice %1 {offsets = [3, 0], sizes = [1, 64], strides = [1, 1]} : vector<9x64xf32> to vector<1x64xf32>
    %9 = vector.shape_cast %8 : vector<1x64xf32> to vector<64xf32>
    %10 = vector.extract_strided_slice %1 {offsets = [4, 0], sizes = [1, 64], strides = [1, 1]} : vector<9x64xf32> to vector<1x64xf32>
    %11 = vector.shape_cast %10 : vector<1x64xf32> to vector<64xf32>
    %12 = vector.extract_strided_slice %1 {offsets = [5, 0], sizes = [1, 64], strides = [1, 1]} : vector<9x64xf32> to vector<1x64xf32>
    %13 = vector.shape_cast %12 : vector<1x64xf32> to vector<64xf32>
    %14 = vector.extract_strided_slice %1 {offsets = [6, 0], sizes = [1, 64], strides = [1, 1]} : vector<9x64xf32> to vector<1x64xf32>
    %15 = vector.shape_cast %14 : vector<1x64xf32> to vector<64xf32>
    %16 = vector.extract_strided_slice %1 {offsets = [7, 0], sizes = [1, 64], strides = [1, 1]} : vector<9x64xf32> to vector<1x64xf32>
    %17 = vector.shape_cast %16 : vector<1x64xf32> to vector<64xf32>
    %18 = vector.extract_strided_slice %1 {offsets = [8, 0], sizes = [1, 64], strides = [1, 1]} : vector<9x64xf32> to vector<1x64xf32>
    %19 = vector.shape_cast %18 : vector<1x64xf32> to vector<64xf32>
    %c0_1 = arith.constant 0 : index
    %c0_2 = arith.constant 0 : index
    %20 = vector.load %arg6[%c0_1, %c0_2] : memref<1x64xf32, #tpu.memory_space<vmem>>, vector<1x64xf32>
    %21 = vector.shape_cast %20 : vector<1x64xf32> to vector<64xf32>
    %22 = tpu.iota {dimensions = array<i32: 0>} : vector<16x1xi32>
    %c1_i32 = arith.constant 1 : i32
    %23 = vector.broadcast %c1_i32 : i32 to vector<16x1xi32>
    %24 = arith.cmpi sge, %22, %23 : vector<16x1xi32>
    %c14_i32 = arith.constant 14 : i32
    %25 = vector.broadcast %c14_i32 : i32 to vector<16x1xi32>
    %26 = arith.cmpi sle, %22, %25 : vector<16x1xi32>
    %c0_i32 = arith.constant 0 : i32
    %27 = arith.cmpi sgt, %0, %c0_i32 : i32
    %c0_3 = arith.constant 0 : index
    %c0_4 = arith.constant 0 : index
    %c0_5 = arith.constant 0 : index
    %c0_6 = arith.constant 0 : index
    %28 = vector.load %arg3[%c0_3, %c0_4, %c0_5, %c0_6] : memref<1x1x16x64xf32, #tpu.memory_space<vmem>>, vector<1x1x16x64xf32>
    %29 = vector.shape_cast %28 : vector<1x1x16x64xf32> to vector<16x64xf32>
    %cst = arith.constant 0.000000e+00 : f32
    %30 = vector.broadcast %cst : f32 to vector<16x64xf32>
    %31 = arith.select %27, %29, %30 : vector<16x64xf32>
    %c8_i32_7 = arith.constant 8 : i32
    %32 = arith.addi %0, %c8_i32_7 : i32
    %c16_i32 = arith.constant 16 : i32
    %33 = arith.cmpi slt, %32, %c16_i32 : i32
    %c0_8 = arith.constant 0 : index
    %c0_9 = arith.constant 0 : index
    %c0_10 = arith.constant 0 : index
    %c0_11 = arith.constant 0 : index
    %34 = vector.load %arg4[%c0_8, %c0_9, %c0_10, %c0_11] : memref<1x1x16x64xf32, #tpu.memory_space<vmem>>, vector<1x1x16x64xf32>
    %35 = vector.shape_cast %34 : vector<1x1x16x64xf32> to vector<16x64xf32>
    %cst_12 = arith.constant 0.000000e+00 : f32
    %36 = vector.broadcast %cst_12 : f32 to vector<16x64xf32>
    %37 = arith.select %33, %35, %36 : vector<16x64xf32>
    %c0_13 = arith.constant 0 : index
    %c0_14 = arith.constant 0 : index
    %c0_15 = arith.constant 0 : index
    %c0_16 = arith.constant 0 : index
    %38 = vector.load %arg2[%c0_13, %c0_14, %c0_15, %c0_16] : memref<1x8x16x64xf32, #tpu.memory_space<vmem>>, vector<1x1x16x64xf32>
    %39 = vector.shape_cast %38 : vector<1x1x16x64xf32> to vector<16x64xf32>
    %c0_17 = arith.constant 0 : index
    %c1 = arith.constant 1 : index
    %c0_18 = arith.constant 0 : index
    %c0_19 = arith.constant 0 : index
    %40 = vector.load %arg2[%c0_17, %c1, %c0_18, %c0_19] : memref<1x8x16x64xf32, #tpu.memory_space<vmem>>, vector<1x1x16x64xf32>
    %41 = vector.shape_cast %40 : vector<1x1x16x64xf32> to vector<16x64xf32>
    %42 = vector.shape_cast %11 : vector<64xf32> to vector<1x64xf32>
    %43 = vector.broadcast %42 : vector<1x64xf32> to vector<16x64xf32>
    %44 = arith.mulf %39, %43 : vector<16x64xf32>
    %c1_i32_20 = arith.constant 1 : i32
    %45 = tpu.dynamic_rotate %39 by %c1_i32_20 dim 0 : vector<16x64xf32>, i32 -> vector<16x64xf32>
    %cst_21 = arith.constant 0.000000e+00 : f32
    %46 = vector.shape_cast %24 : vector<16x1xi1> to vector<16x1xi1>
    %47 = vector.broadcast %46 : vector<16x1xi1> to vector<16x64xi1>
    %48 = vector.broadcast %cst_21 : f32 to vector<16x64xf32>
    %49 = arith.select %47, %45, %48 : vector<16x64xi1>, vector<16x64xf32>
    %50 = vector.shape_cast %9 : vector<64xf32> to vector<1x64xf32>
    %51 = vector.broadcast %50 : vector<1x64xf32> to vector<16x64xf32>
    %52 = arith.mulf %49, %51 : vector<16x64xf32>
    %53 = arith.addf %44, %52 : vector<16x64xf32>
    %c15_i32 = arith.constant 15 : i32
    %54 = tpu.dynamic_rotate %39 by %c15_i32 dim 0 : vector<16x64xf32>, i32 -> vector<16x64xf32>
    %cst_22 = arith.constant 0.000000e+00 : f32
    %55 = vector.shape_cast %26 : vector<16x1xi1> to vector<16x1xi1>
    %56 = vector.broadcast %55 : vector<16x1xi1> to vector<16x64xi1>
    %57 = vector.broadcast %cst_22 : f32 to vector<16x64xf32>
    %58 = arith.select %56, %54, %57 : vector<16x64xi1>, vector<16x64xf32>
    %59 = vector.shape_cast %13 : vector<64xf32> to vector<1x64xf32>
    %60 = vector.broadcast %59 : vector<1x64xf32> to vector<16x64xf32>
    %61 = arith.mulf %58, %60 : vector<16x64xf32>
    %62 = arith.addf %53, %61 : vector<16x64xf32>
    %63 = vector.shape_cast %21 : vector<64xf32> to vector<1x64xf32>
    %64 = vector.broadcast %63 : vector<1x64xf32> to vector<16x64xf32>
    %65 = arith.addf %64, %62 : vector<16x64xf32>
    %66 = vector.shape_cast %5 : vector<64xf32> to vector<1x64xf32>
    %67 = vector.broadcast %66 : vector<1x64xf32> to vector<16x64xf32>
    %68 = arith.mulf %31, %67 : vector<16x64xf32>
    %c1_i32_23 = arith.constant 1 : i32
    %69 = tpu.dynamic_rotate %31 by %c1_i32_23 dim 0 : vector<16x64xf32>, i32 -> vector<16x64xf32>
    %cst_24 = arith.constant 0.000000e+00 : f32
    %70 = vector.shape_cast %24 : vector<16x1xi1> to vector<16x1xi1>
    %71 = vector.broadcast %70 : vector<16x1xi1> to vector<16x64xi1>
    %72 = vector.broadcast %cst_24 : f32 to vector<16x64xf32>
    %73 = arith.select %71, %69, %72 : vector<16x64xi1>, vector<16x64xf32>
    %74 = vector.shape_cast %3 : vector<64xf32> to vector<1x64xf32>
    %75 = vector.broadcast %74 : vector<1x64xf32> to vector<16x64xf32>
    %76 = arith.mulf %73, %75 : vector<16x64xf32>
    %77 = arith.addf %68, %76 : vector<16x64xf32>
    %c15_i32_25 = arith.constant 15 : i32
    %78 = tpu.dynamic_rotate %31 by %c15_i32_25 dim 0 : vector<16x64xf32>, i32 -> vector<16x64xf32>
    %cst_26 = arith.constant 0.000000e+00 : f32
    %79 = vector.shape_cast %26 : vector<16x1xi1> to vector<16x1xi1>
    %80 = vector.broadcast %79 : vector<16x1xi1> to vector<16x64xi1>
    %81 = vector.broadcast %cst_26 : f32 to vector<16x64xf32>
    %82 = arith.select %80, %78, %81 : vector<16x64xi1>, vector<16x64xf32>
    %83 = vector.shape_cast %7 : vector<64xf32> to vector<1x64xf32>
    %84 = vector.broadcast %83 : vector<1x64xf32> to vector<16x64xf32>
    %85 = arith.mulf %82, %84 : vector<16x64xf32>
    %86 = arith.addf %77, %85 : vector<16x64xf32>
    %87 = arith.addf %65, %86 : vector<16x64xf32>
    %88 = vector.shape_cast %17 : vector<64xf32> to vector<1x64xf32>
    %89 = vector.broadcast %88 : vector<1x64xf32> to vector<16x64xf32>
    %90 = arith.mulf %41, %89 : vector<16x64xf32>
    %c1_i32_27 = arith.constant 1 : i32
    %91 = tpu.dynamic_rotate %41 by %c1_i32_27 dim 0 : vector<16x64xf32>, i32 -> vector<16x64xf32>
    %cst_28 = arith.constant 0.000000e+00 : f32
    %92 = vector.shape_cast %24 : vector<16x1xi1> to vector<16x1xi1>
    %93 = vector.broadcast %92 : vector<16x1xi1> to vector<16x64xi1>
    %94 = vector.broadcast %cst_28 : f32 to vector<16x64xf32>
    %95 = arith.select %93, %91, %94 : vector<16x64xi1>, vector<16x64xf32>
    %96 = vector.shape_cast %15 : vector<64xf32> to vector<1x64xf32>
    %97 = vector.broadcast %96 : vector<1x64xf32> to vector<16x64xf32>
    %98 = arith.mulf %95, %97 : vector<16x64xf32>
    %99 = arith.addf %90, %98 : vector<16x64xf32>
    %c15_i32_29 = arith.constant 15 : i32
    %100 = tpu.dynamic_rotate %41 by %c15_i32_29 dim 0 : vector<16x64xf32>, i32 -> vector<16x64xf32>
    %cst_30 = arith.constant 0.000000e+00 : f32
    %101 = vector.shape_cast %26 : vector<16x1xi1> to vector<16x1xi1>
    %102 = vector.broadcast %101 : vector<16x1xi1> to vector<16x64xi1>
    %103 = vector.broadcast %cst_30 : f32 to vector<16x64xf32>
    %104 = arith.select %102, %100, %103 : vector<16x64xi1>, vector<16x64xf32>
    %105 = vector.shape_cast %19 : vector<64xf32> to vector<1x64xf32>
    %106 = vector.broadcast %105 : vector<1x64xf32> to vector<16x64xf32>
    %107 = arith.mulf %104, %106 : vector<16x64xf32>
    %108 = arith.addf %99, %107 : vector<16x64xf32>
    %109 = arith.addf %87, %108 : vector<16x64xf32>
    %c0_31 = arith.constant 0 : index
    %c0_32 = arith.constant 0 : index
    %c0_33 = arith.constant 0 : index
    %c0_34 = arith.constant 0 : index
    %110 = vector.load %arg7[%c0_31, %c0_32, %c0_33, %c0_34] : memref<1x8x16x64xf32, #tpu.memory_space<vmem>>, vector<1x1x16x64xf32>
    %111 = vector.shape_cast %110 : vector<1x1x16x64xf32> to vector<16x64xf32>
    %112 = vector.shape_cast %109 : vector<16x64xf32> to vector<1x1x16x64xf32>
    tpu.vector_store %arg7[%c0_31, %c0_32, %c0_33, %c0_34], %112 {strides = array<i32>} : memref<1x8x16x64xf32, #tpu.memory_space<vmem>>, vector<1x1x16x64xf32>,
    %c0_35 = arith.constant 0 : index
    %c2 = arith.constant 2 : index
    %c0_36 = arith.constant 0 : index
    %c0_37 = arith.constant 0 : index
    %113 = vector.load %arg2[%c0_35, %c2, %c0_36, %c0_37] : memref<1x8x16x64xf32, #tpu.memory_space<vmem>>, vector<1x1x16x64xf32>
    %114 = vector.shape_cast %113 : vector<1x1x16x64xf32> to vector<16x64xf32>
    %115 = vector.shape_cast %11 : vector<64xf32> to vector<1x64xf32>
    %116 = vector.broadcast %115 : vector<1x64xf32> to vector<16x64xf32>
    %117 = arith.mulf %41, %116 : vector<16x64xf32>
    %c1_i32_38 = arith.constant 1 : i32
    %118 = tpu.dynamic_rotate %41 by %c1_i32_38 dim 0 : vector<16x64xf32>, i32 -> vector<16x64xf32>
    %cst_39 = arith.constant 0.000000e+00 : f32
    %119 = vector.shape_cast %24 : vector<16x1xi1> to vector<16x1xi1>
    %120 = vector.broadcast %119 : vector<16x1xi1> to vector<16x64xi1>
    %121 = vector.broadcast %cst_39 : f32 to vector<16x64xf32>
    %122 = arith.select %120, %118, %121 : vector<16x64xi1>, vector<16x64xf32>
    %123 = vector.shape_cast %9 : vector<64xf32> to vector<1x64xf32>
    %124 = vector.broadcast %123 : vector<1x64xf32> to vector<16x64xf32>
    %125 = arith.mulf %122, %124 : vector<16x64xf32>
    %126 = arith.addf %117, %125 : vector<16x64xf32>
    %c15_i32_40 = arith.constant 15 : i32
    %127 = tpu.dynamic_rotate %41 by %c15_i32_40 dim 0 : vector<16x64xf32>, i32 -> vector<16x64xf32>
    %cst_41 = arith.constant 0.000000e+00 : f32
    %128 = vector.shape_cast %26 : vector<16x1xi1> to vector<16x1xi1>
    %129 = vector.broadcast %128 : vector<16x1xi1> to vector<16x64xi1>
    %130 = vector.broadcast %cst_41 : f32 to vector<16x64xf32>
    %131 = arith.select %129, %127, %130 : vector<16x64xi1>, vector<16x64xf32>
    %132 = vector.shape_cast %13 : vector<64xf32> to vector<1x64xf32>
    %133 = vector.broadcast %132 : vector<1x64xf32> to vector<16x64xf32>
    %134 = arith.mulf %131, %133 : vector<16x64xf32>
    %135 = arith.addf %126, %134 : vector<16x64xf32>
    %136 = vector.shape_cast %21 : vector<64xf32> to vector<1x64xf32>
    %137 = vector.broadcast %136 : vector<1x64xf32> to vector<16x64xf32>
    %138 = arith.addf %137, %135 : vector<16x64xf32>
    %139 = vector.shape_cast %5 : vector<64xf32> to vector<1x64xf32>
    %140 = vector.broadcast %139 : vector<1x64xf32> to vector<16x64xf32>
    %141 = arith.mulf %39, %140 : vector<16x64xf32>
    %c1_i32_42 = arith.constant 1 : i32
    %142 = tpu.dynamic_rotate %39 by %c1_i32_42 dim 0 : vector<16x64xf32>, i32 -> vector<16x64xf32>
    %cst_43 = arith.constant 0.000000e+00 : f32
    %143 = vector.shape_cast %24 : vector<16x1xi1> to vector<16x1xi1>
    %144 = vector.broadcast %143 : vector<16x1xi1> to vector<16x64xi1>
    %145 = vector.broadcast %cst_43 : f32 to vector<16x64xf32>
    %146 = arith.select %144, %142, %145 : vector<16x64xi1>, vector<16x64xf32>
    %147 = vector.shape_cast %3 : vector<64xf32> to vector<1x64xf32>
    %148 = vector.broadcast %147 : vector<1x64xf32> to vector<16x64xf32>
    %149 = arith.mulf %146, %148 : vector<16x64xf32>
    %150 = arith.addf %141, %149 : vector<16x64xf32>
    %c15_i32_44 = arith.constant 15 : i32
    %151 = tpu.dynamic_rotate %39 by %c15_i32_44 dim 0 : vector<16x64xf32>, i32 -> vector<16x64xf32>
    %cst_45 = arith.constant 0.000000e+00 : f32
    %152 = vector.shape_cast %26 : vector<16x1xi1> to vector<16x1xi1>
    %153 = vector.broadcast %152 : vector<16x1xi1> to vector<16x64xi1>
    %154 = vector.broadcast %cst_45 : f32 to vector<16x64xf32>
    %155 = arith.select %153, %151, %154 : vector<16x64xi1>, vector<16x64xf32>
    %156 = vector.shape_cast %7 : vector<64xf32> to vector<1x64xf32>
    %157 = vector.broadcast %156 : vector<1x64xf32> to vector<16x64xf32>
    %158 = arith.mulf %155, %157 : vector<16x64xf32>
    %159 = arith.addf %150, %158 : vector<16x64xf32>
    %160 = arith.addf %138, %159 : vector<16x64xf32>
    %161 = vector.shape_cast %17 : vector<64xf32> to vector<1x64xf32>
    %162 = vector.broadcast %161 : vector<1x64xf32> to vector<16x64xf32>
    %163 = arith.mulf %114, %162 : vector<16x64xf32>
    %c1_i32_46 = arith.constant 1 : i32
    %164 = tpu.dynamic_rotate %114 by %c1_i32_46 dim 0 : vector<16x64xf32>, i32 -> vector<16x64xf32>
    %cst_47 = arith.constant 0.000000e+00 : f32
    %165 = vector.shape_cast %24 : vector<16x1xi1> to vector<16x1xi1>
    %166 = vector.broadcast %165 : vector<16x1xi1> to vector<16x64xi1>
    %167 = vector.broadcast %cst_47 : f32 to vector<16x64xf32>
    %168 = arith.select %166, %164, %167 : vector<16x64xi1>, vector<16x64xf32>
    %169 = vector.shape_cast %15 : vector<64xf32> to vector<1x64xf32>
    %170 = vector.broadcast %169 : vector<1x64xf32> to vector<16x64xf32>
    %171 = arith.mulf %168, %170 : vector<16x64xf32>
    %172 = arith.addf %163, %171 : vector<16x64xf32>
    %c15_i32_48 = arith.constant 15 : i32
    %173 = tpu.dynamic_rotate %114 by %c15_i32_48 dim 0 : vector<16x64xf32>, i32 -> vector<16x64xf32>
    %cst_49 = arith.constant 0.000000e+00 : f32
    %174 = vector.shape_cast %26 : vector<16x1xi1> to vector<16x1xi1>
    %175 = vector.broadcast %174 : vector<16x1xi1> to vector<16x64xi1>
    %176 = vector.broadcast %cst_49 : f32 to vector<16x64xf32>
    %177 = arith.select %175, %173, %176 : vector<16x64xi1>, vector<16x64xf32>
    %178 = vector.shape_cast %19 : vector<64xf32> to vector<1x64xf32>
    %179 = vector.broadcast %178 : vector<1x64xf32> to vector<16x64xf32>
    %180 = arith.mulf %177, %179 : vector<16x64xf32>
    %181 = arith.addf %172, %180 : vector<16x64xf32>
    %182 = arith.addf %160, %181 : vector<16x64xf32>
    %c0_50 = arith.constant 0 : index
    %c1_51 = arith.constant 1 : index
    %c0_52 = arith.constant 0 : index
    %c0_53 = arith.constant 0 : index
    %183 = vector.load %arg7[%c0_50, %c1_51, %c0_52, %c0_53] : memref<1x8x16x64xf32, #tpu.memory_space<vmem>>, vector<1x1x16x64xf32>
    %184 = vector.shape_cast %183 : vector<1x1x16x64xf32> to vector<16x64xf32>
    %185 = vector.shape_cast %182 : vector<16x64xf32> to vector<1x1x16x64xf32>
    tpu.vector_store %arg7[%c0_50, %c1_51, %c0_52, %c0_53], %185 {strides = array<i32>} : memref<1x8x16x64xf32, #tpu.memory_space<vmem>>, vector<1x1x16x64xf32>,
    %c0_54 = arith.constant 0 : index
    %c3 = arith.constant 3 : index
    %c0_55 = arith.constant 0 : index
    %c0_56 = arith.constant 0 : index
    %186 = vector.load %arg2[%c0_54, %c3, %c0_55, %c0_56] : memref<1x8x16x64xf32, #tpu.memory_space<vmem>>, vector<1x1x16x64xf32>
    %187 = vector.shape_cast %186 : vector<1x1x16x64xf32> to vector<16x64xf32>
    %188 = vector.shape_cast %11 : vector<64xf32> to vector<1x64xf32>
    %189 = vector.broadcast %188 : vector<1x64xf32> to vector<16x64xf32>
    %190 = arith.mulf %114, %189 : vector<16x64xf32>
    %c1_i32_57 = arith.constant 1 : i32
    %191 = tpu.dynamic_rotate %114 by %c1_i32_57 dim 0 : vector<16x64xf32>, i32 -> vector<16x64xf32>
    %cst_58 = arith.constant 0.000000e+00 : f32
    %192 = vector.shape_cast %24 : vector<16x1xi1> to vector<16x1xi1>
    %193 = vector.broadcast %192 : vector<16x1xi1> to vector<16x64xi1>
    %194 = vector.broadcast %cst_58 : f32 to vector<16x64xf32>
    %195 = arith.select %193, %191, %194 : vector<16x64xi1>, vector<16x64xf32>
    %196 = vector.shape_cast %9 : vector<64xf32> to vector<1x64xf32>
    %197 = vector.broadcast %196 : vector<1x64xf32> to vector<16x64xf32>
    %198 = arith.mulf %195, %197 : vector<16x64xf32>
    %199 = arith.addf %190, %198 : vector<16x64xf32>
    %c15_i32_59 = arith.constant 15 : i32
    %200 = tpu.dynamic_rotate %114 by %c15_i32_59 dim 0 : vector<16x64xf32>, i32 -> vector<16x64xf32>
    %cst_60 = arith.constant 0.000000e+00 : f32
    %201 = vector.shape_cast %26 : vector<16x1xi1> to vector<16x1xi1>
    %202 = vector.broadcast %201 : vector<16x1xi1> to vector<16x64xi1>
    %203 = vector.broadcast %cst_60 : f32 to vector<16x64xf32>
    %204 = arith.select %202, %200, %203 : vector<16x64xi1>, vector<16x64xf32>
    %205 = vector.shape_cast %13 : vector<64xf32> to vector<1x64xf32>
    %206 = vector.broadcast %205 : vector<1x64xf32> to vector<16x64xf32>
    %207 = arith.mulf %204, %206 : vector<16x64xf32>
    %208 = arith.addf %199, %207 : vector<16x64xf32>
    %209 = vector.shape_cast %21 : vector<64xf32> to vector<1x64xf32>
    %210 = vector.broadcast %209 : vector<1x64xf32> to vector<16x64xf32>
    %211 = arith.addf %210, %208 : vector<16x64xf32>
    %212 = vector.shape_cast %5 : vector<64xf32> to vector<1x64xf32>
    %213 = vector.broadcast %212 : vector<1x64xf32> to vector<16x64xf32>
    %214 = arith.mulf %41, %213 : vector<16x64xf32>
    %c1_i32_61 = arith.constant 1 : i32
    %215 = tpu.dynamic_rotate %41 by %c1_i32_61 dim 0 : vector<16x64xf32>, i32 -> vector<16x64xf32>
    %cst_62 = arith.constant 0.000000e+00 : f32
    %216 = vector.shape_cast %24 : vector<16x1xi1> to vector<16x1xi1>
    %217 = vector.broadcast %216 : vector<16x1xi1> to vector<16x64xi1>
    %218 = vector.broadcast %cst_62 : f32 to vector<16x64xf32>
    %219 = arith.select %217, %215, %218 : vector<16x64xi1>, vector<16x64xf32>
    %220 = vector.shape_cast %3 : vector<64xf32> to vector<1x64xf32>
    %221 = vector.broadcast %220 : vector<1x64xf32> to vector<16x64xf32>
    %222 = arith.mulf %219, %221 : vector<16x64xf32>
    %223 = arith.addf %214, %222 : vector<16x64xf32>
    %c15_i32_63 = arith.constant 15 : i32
    %224 = tpu.dynamic_rotate %41 by %c15_i32_63 dim 0 : vector<16x64xf32>, i32 -> vector<16x64xf32>
    %cst_64 = arith.constant 0.000000e+00 : f32
    %225 = vector.shape_cast %26 : vector<16x1xi1> to vector<16x1xi1>
    %226 = vector.broadcast %225 : vector<16x1xi1> to vector<16x64xi1>
    %227 = vector.broadcast %cst_64 : f32 to vector<16x64xf32>
    %228 = arith.select %226, %224, %227 : vector<16x64xi1>, vector<16x64xf32>
    %229 = vector.shape_cast %7 : vector<64xf32> to vector<1x64xf32>
    %230 = vector.broadcast %229 : vector<1x64xf32> to vector<16x64xf32>
    %231 = arith.mulf %228, %230 : vector<16x64xf32>
    %232 = arith.addf %223, %231 : vector<16x64xf32>
    %233 = arith.addf %211, %232 : vector<16x64xf32>
    %234 = vector.shape_cast %17 : vector<64xf32> to vector<1x64xf32>
    %235 = vector.broadcast %234 : vector<1x64xf32> to vector<16x64xf32>
    %236 = arith.mulf %187, %235 : vector<16x64xf32>
    %c1_i32_65 = arith.constant 1 : i32
    %237 = tpu.dynamic_rotate %187 by %c1_i32_65 dim 0 : vector<16x64xf32>, i32 -> vector<16x64xf32>
    %cst_66 = arith.constant 0.000000e+00 : f32
    %238 = vector.shape_cast %24 : vector<16x1xi1> to vector<16x1xi1>
    %239 = vector.broadcast %238 : vector<16x1xi1> to vector<16x64xi1>
    %240 = vector.broadcast %cst_66 : f32 to vector<16x64xf32>
    %241 = arith.select %239, %237, %240 : vector<16x64xi1>, vector<16x64xf32>
    %242 = vector.shape_cast %15 : vector<64xf32> to vector<1x64xf32>
    %243 = vector.broadcast %242 : vector<1x64xf32> to vector<16x64xf32>
    %244 = arith.mulf %241, %243 : vector<16x64xf32>
    %245 = arith.addf %236, %244 : vector<16x64xf32>
    %c15_i32_67 = arith.constant 15 : i32
    %246 = tpu.dynamic_rotate %187 by %c15_i32_67 dim 0 : vector<16x64xf32>, i32 -> vector<16x64xf32>
    %cst_68 = arith.constant 0.000000e+00 : f32
    %247 = vector.shape_cast %26 : vector<16x1xi1> to vector<16x1xi1>
    %248 = vector.broadcast %247 : vector<16x1xi1> to vector<16x64xi1>
    %249 = vector.broadcast %cst_68 : f32 to vector<16x64xf32>
    %250 = arith.select %248, %246, %249 : vector<16x64xi1>, vector<16x64xf32>
    %251 = vector.shape_cast %19 : vector<64xf32> to vector<1x64xf32>
    %252 = vector.broadcast %251 : vector<1x64xf32> to vector<16x64xf32>
    %253 = arith.mulf %250, %252 : vector<16x64xf32>
    %254 = arith.addf %245, %253 : vector<16x64xf32>
    %255 = arith.addf %233, %254 : vector<16x64xf32>
    %c0_69 = arith.constant 0 : index
    %c2_70 = arith.constant 2 : index
    %c0_71 = arith.constant 0 : index
    %c0_72 = arith.constant 0 : index
    %256 = vector.load %arg7[%c0_69, %c2_70, %c0_71, %c0_72] : memref<1x8x16x64xf32, #tpu.memory_space<vmem>>, vector<1x1x16x64xf32>
    %257 = vector.shape_cast %256 : vector<1x1x16x64xf32> to vector<16x64xf32>
    %258 = vector.shape_cast %255 : vector<16x64xf32> to vector<1x1x16x64xf32>
    tpu.vector_store %arg7[%c0_69, %c2_70, %c0_71, %c0_72], %258 {strides = array<i32>} : memref<1x8x16x64xf32, #tpu.memory_space<vmem>>, vector<1x1x16x64xf32>,
    %c0_73 = arith.constant 0 : index
    %c4 = arith.constant 4 : index
    %c0_74 = arith.constant 0 : index
    %c0_75 = arith.constant 0 : index
    %259 = vector.load %arg2[%c0_73, %c4, %c0_74, %c0_75] : memref<1x8x16x64xf32, #tpu.memory_space<vmem>>, vector<1x1x16x64xf32>
    %260 = vector.shape_cast %259 : vector<1x1x16x64xf32> to vector<16x64xf32>
    %261 = vector.shape_cast %11 : vector<64xf32> to vector<1x64xf32>
    %262 = vector.broadcast %261 : vector<1x64xf32> to vector<16x64xf32>
    %263 = arith.mulf %187, %262 : vector<16x64xf32>
    %c1_i32_76 = arith.constant 1 : i32
    %264 = tpu.dynamic_rotate %187 by %c1_i32_76 dim 0 : vector<16x64xf32>, i32 -> vector<16x64xf32>
    %cst_77 = arith.constant 0.000000e+00 : f32
    %265 = vector.shape_cast %24 : vector<16x1xi1> to vector<16x1xi1>
    %266 = vector.broadcast %265 : vector<16x1xi1> to vector<16x64xi1>
    %267 = vector.broadcast %cst_77 : f32 to vector<16x64xf32>
    %268 = arith.select %266, %264, %267 : vector<16x64xi1>, vector<16x64xf32>
    %269 = vector.shape_cast %9 : vector<64xf32> to vector<1x64xf32>
    %270 = vector.broadcast %269 : vector<1x64xf32> to vector<16x64xf32>
    %271 = arith.mulf %268, %270 : vector<16x64xf32>
    %272 = arith.addf %263, %271 : vector<16x64xf32>
    %c15_i32_78 = arith.constant 15 : i32
    %273 = tpu.dynamic_rotate %187 by %c15_i32_78 dim 0 : vector<16x64xf32>, i32 -> vector<16x64xf32>
    %cst_79 = arith.constant 0.000000e+00 : f32
    %274 = vector.shape_cast %26 : vector<16x1xi1> to vector<16x1xi1>
    %275 = vector.broadcast %274 : vector<16x1xi1> to vector<16x64xi1>
    %276 = vector.broadcast %cst_79 : f32 to vector<16x64xf32>
    %277 = arith.select %275, %273, %276 : vector<16x64xi1>, vector<16x64xf32>
    %278 = vector.shape_cast %13 : vector<64xf32> to vector<1x64xf32>
    %279 = vector.broadcast %278 : vector<1x64xf32> to vector<16x64xf32>
    %280 = arith.mulf %277, %279 : vector<16x64xf32>
    %281 = arith.addf %272, %280 : vector<16x64xf32>
    %282 = vector.shape_cast %21 : vector<64xf32> to vector<1x64xf32>
    %283 = vector.broadcast %282 : vector<1x64xf32> to vector<16x64xf32>
    %284 = arith.addf %283, %281 : vector<16x64xf32>
    %285 = vector.shape_cast %5 : vector<64xf32> to vector<1x64xf32>
    %286 = vector.broadcast %285 : vector<1x64xf32> to vector<16x64xf32>
    %287 = arith.mulf %114, %286 : vector<16x64xf32>
    %c1_i32_80 = arith.constant 1 : i32
    %288 = tpu.dynamic_rotate %114 by %c1_i32_80 dim 0 : vector<16x64xf32>, i32 -> vector<16x64xf32>
    %cst_81 = arith.constant 0.000000e+00 : f32
    %289 = vector.shape_cast %24 : vector<16x1xi1> to vector<16x1xi1>
    %290 = vector.broadcast %289 : vector<16x1xi1> to vector<16x64xi1>
    %291 = vector.broadcast %cst_81 : f32 to vector<16x64xf32>
    %292 = arith.select %290, %288, %291 : vector<16x64xi1>, vector<16x64xf32>
    %293 = vector.shape_cast %3 : vector<64xf32> to vector<1x64xf32>
    %294 = vector.broadcast %293 : vector<1x64xf32> to vector<16x64xf32>
    %295 = arith.mulf %292, %294 : vector<16x64xf32>
    %296 = arith.addf %287, %295 : vector<16x64xf32>
    %c15_i32_82 = arith.constant 15 : i32
    %297 = tpu.dynamic_rotate %114 by %c15_i32_82 dim 0 : vector<16x64xf32>, i32 -> vector<16x64xf32>
    %cst_83 = arith.constant 0.000000e+00 : f32
    %298 = vector.shape_cast %26 : vector<16x1xi1> to vector<16x1xi1>
    %299 = vector.broadcast %298 : vector<16x1xi1> to vector<16x64xi1>
    %300 = vector.broadcast %cst_83 : f32 to vector<16x64xf32>
    %301 = arith.select %299, %297, %300 : vector<16x64xi1>, vector<16x64xf32>
    %302 = vector.shape_cast %7 : vector<64xf32> to vector<1x64xf32>
    %303 = vector.broadcast %302 : vector<1x64xf32> to vector<16x64xf32>
    %304 = arith.mulf %301, %303 : vector<16x64xf32>
    %305 = arith.addf %296, %304 : vector<16x64xf32>
    %306 = arith.addf %284, %305 : vector<16x64xf32>
    %307 = vector.shape_cast %17 : vector<64xf32> to vector<1x64xf32>
    %308 = vector.broadcast %307 : vector<1x64xf32> to vector<16x64xf32>
    %309 = arith.mulf %260, %308 : vector<16x64xf32>
    %c1_i32_84 = arith.constant 1 : i32
    %310 = tpu.dynamic_rotate %260 by %c1_i32_84 dim 0 : vector<16x64xf32>, i32 -> vector<16x64xf32>
    %cst_85 = arith.constant 0.000000e+00 : f32
    %311 = vector.shape_cast %24 : vector<16x1xi1> to vector<16x1xi1>
    %312 = vector.broadcast %311 : vector<16x1xi1> to vector<16x64xi1>
    %313 = vector.broadcast %cst_85 : f32 to vector<16x64xf32>
    %314 = arith.select %312, %310, %313 : vector<16x64xi1>, vector<16x64xf32>
    %315 = vector.shape_cast %15 : vector<64xf32> to vector<1x64xf32>
    %316 = vector.broadcast %315 : vector<1x64xf32> to vector<16x64xf32>
    %317 = arith.mulf %314, %316 : vector<16x64xf32>
    %318 = arith.addf %309, %317 : vector<16x64xf32>
    %c15_i32_86 = arith.constant 15 : i32
    %319 = tpu.dynamic_rotate %260 by %c15_i32_86 dim 0 : vector<16x64xf32>, i32 -> vector<16x64xf32>
    %cst_87 = arith.constant 0.000000e+00 : f32
    %320 = vector.shape_cast %26 : vector<16x1xi1> to vector<16x1xi1>
    %321 = vector.broadcast %320 : vector<16x1xi1> to vector<16x64xi1>
    %322 = vector.broadcast %cst_87 : f32 to vector<16x64xf32>
    %323 = arith.select %321, %319, %322 : vector<16x64xi1>, vector<16x64xf32>
    %324 = vector.shape_cast %19 : vector<64xf32> to vector<1x64xf32>
    %325 = vector.broadcast %324 : vector<1x64xf32> to vector<16x64xf32>
    %326 = arith.mulf %323, %325 : vector<16x64xf32>
    %327 = arith.addf %318, %326 : vector<16x64xf32>
    %328 = arith.addf %306, %327 : vector<16x64xf32>
    %c0_88 = arith.constant 0 : index
    %c3_89 = arith.constant 3 : index
    %c0_90 = arith.constant 0 : index
    %c0_91 = arith.constant 0 : index
    %329 = vector.load %arg7[%c0_88, %c3_89, %c0_90, %c0_91] : memref<1x8x16x64xf32, #tpu.memory_space<vmem>>, vector<1x1x16x64xf32>
    %330 = vector.shape_cast %329 : vector<1x1x16x64xf32> to vector<16x64xf32>
    %331 = vector.shape_cast %328 : vector<16x64xf32> to vector<1x1x16x64xf32>
    tpu.vector_store %arg7[%c0_88, %c3_89, %c0_90, %c0_91], %331 {strides = array<i32>} : memref<1x8x16x64xf32, #tpu.memory_space<vmem>>, vector<1x1x16x64xf32>,
    %c0_92 = arith.constant 0 : index
    %c5 = arith.constant 5 : index
    %c0_93 = arith.constant 0 : index
    %c0_94 = arith.constant 0 : index
    %332 = vector.load %arg2[%c0_92, %c5, %c0_93, %c0_94] : memref<1x8x16x64xf32, #tpu.memory_space<vmem>>, vector<1x1x16x64xf32>
    %333 = vector.shape_cast %332 : vector<1x1x16x64xf32> to vector<16x64xf32>
    %334 = vector.shape_cast %11 : vector<64xf32> to vector<1x64xf32>
    %335 = vector.broadcast %334 : vector<1x64xf32> to vector<16x64xf32>
    %336 = arith.mulf %260, %335 : vector<16x64xf32>
    %c1_i32_95 = arith.constant 1 : i32
    %337 = tpu.dynamic_rotate %260 by %c1_i32_95 dim 0 : vector<16x64xf32>, i32 -> vector<16x64xf32>
    %cst_96 = arith.constant 0.000000e+00 : f32
    %338 = vector.shape_cast %24 : vector<16x1xi1> to vector<16x1xi1>
    %339 = vector.broadcast %338 : vector<16x1xi1> to vector<16x64xi1>
    %340 = vector.broadcast %cst_96 : f32 to vector<16x64xf32>
    %341 = arith.select %339, %337, %340 : vector<16x64xi1>, vector<16x64xf32>
    %342 = vector.shape_cast %9 : vector<64xf32> to vector<1x64xf32>
    %343 = vector.broadcast %342 : vector<1x64xf32> to vector<16x64xf32>
    %344 = arith.mulf %341, %343 : vector<16x64xf32>
    %345 = arith.addf %336, %344 : vector<16x64xf32>
    %c15_i32_97 = arith.constant 15 : i32
    %346 = tpu.dynamic_rotate %260 by %c15_i32_97 dim 0 : vector<16x64xf32>, i32 -> vector<16x64xf32>
    %cst_98 = arith.constant 0.000000e+00 : f32
    %347 = vector.shape_cast %26 : vector<16x1xi1> to vector<16x1xi1>
    %348 = vector.broadcast %347 : vector<16x1xi1> to vector<16x64xi1>
    %349 = vector.broadcast %cst_98 : f32 to vector<16x64xf32>
    %350 = arith.select %348, %346, %349 : vector<16x64xi1>, vector<16x64xf32>
    %351 = vector.shape_cast %13 : vector<64xf32> to vector<1x64xf32>
    %352 = vector.broadcast %351 : vector<1x64xf32> to vector<16x64xf32>
    %353 = arith.mulf %350, %352 : vector<16x64xf32>
    %354 = arith.addf %345, %353 : vector<16x64xf32>
    %355 = vector.shape_cast %21 : vector<64xf32> to vector<1x64xf32>
    %356 = vector.broadcast %355 : vector<1x64xf32> to vector<16x64xf32>
    %357 = arith.addf %356, %354 : vector<16x64xf32>
    %358 = vector.shape_cast %5 : vector<64xf32> to vector<1x64xf32>
    %359 = vector.broadcast %358 : vector<1x64xf32> to vector<16x64xf32>
    %360 = arith.mulf %187, %359 : vector<16x64xf32>
    %c1_i32_99 = arith.constant 1 : i32
    %361 = tpu.dynamic_rotate %187 by %c1_i32_99 dim 0 : vector<16x64xf32>, i32 -> vector<16x64xf32>
    %cst_100 = arith.constant 0.000000e+00 : f32
    %362 = vector.shape_cast %24 : vector<16x1xi1> to vector<16x1xi1>
    %363 = vector.broadcast %362 : vector<16x1xi1> to vector<16x64xi1>
    %364 = vector.broadcast %cst_100 : f32 to vector<16x64xf32>
    %365 = arith.select %363, %361, %364 : vector<16x64xi1>, vector<16x64xf32>
    %366 = vector.shape_cast %3 : vector<64xf32> to vector<1x64xf32>
    %367 = vector.broadcast %366 : vector<1x64xf32> to vector<16x64xf32>
    %368 = arith.mulf %365, %367 : vector<16x64xf32>
    %369 = arith.addf %360, %368 : vector<16x64xf32>
    %c15_i32_101 = arith.constant 15 : i32
    %370 = tpu.dynamic_rotate %187 by %c15_i32_101 dim 0 : vector<16x64xf32>, i32 -> vector<16x64xf32>
    %cst_102 = arith.constant 0.000000e+00 : f32
    %371 = vector.shape_cast %26 : vector<16x1xi1> to vector<16x1xi1>
    %372 = vector.broadcast %371 : vector<16x1xi1> to vector<16x64xi1>
    %373 = vector.broadcast %cst_102 : f32 to vector<16x64xf32>
    %374 = arith.select %372, %370, %373 : vector<16x64xi1>, vector<16x64xf32>
    %375 = vector.shape_cast %7 : vector<64xf32> to vector<1x64xf32>
    %376 = vector.broadcast %375 : vector<1x64xf32> to vector<16x64xf32>
    %377 = arith.mulf %374, %376 : vector<16x64xf32>
    %378 = arith.addf %369, %377 : vector<16x64xf32>
    %379 = arith.addf %357, %378 : vector<16x64xf32>
    %380 = vector.shape_cast %17 : vector<64xf32> to vector<1x64xf32>
    %381 = vector.broadcast %380 : vector<1x64xf32> to vector<16x64xf32>
    %382 = arith.mulf %333, %381 : vector<16x64xf32>
    %c1_i32_103 = arith.constant 1 : i32
    %383 = tpu.dynamic_rotate %333 by %c1_i32_103 dim 0 : vector<16x64xf32>, i32 -> vector<16x64xf32>
    %cst_104 = arith.constant 0.000000e+00 : f32
    %384 = vector.shape_cast %24 : vector<16x1xi1> to vector<16x1xi1>
    %385 = vector.broadcast %384 : vector<16x1xi1> to vector<16x64xi1>
    %386 = vector.broadcast %cst_104 : f32 to vector<16x64xf32>
    %387 = arith.select %385, %383, %386 : vector<16x64xi1>, vector<16x64xf32>
    %388 = vector.shape_cast %15 : vector<64xf32> to vector<1x64xf32>
    %389 = vector.broadcast %388 : vector<1x64xf32> to vector<16x64xf32>
    %390 = arith.mulf %387, %389 : vector<16x64xf32>
    %391 = arith.addf %382, %390 : vector<16x64xf32>
    %c15_i32_105 = arith.constant 15 : i32
    %392 = tpu.dynamic_rotate %333 by %c15_i32_105 dim 0 : vector<16x64xf32>, i32 -> vector<16x64xf32>
    %cst_106 = arith.constant 0.000000e+00 : f32
    %393 = vector.shape_cast %26 : vector<16x1xi1> to vector<16x1xi1>
    %394 = vector.broadcast %393 : vector<16x1xi1> to vector<16x64xi1>
    %395 = vector.broadcast %cst_106 : f32 to vector<16x64xf32>
    %396 = arith.select %394, %392, %395 : vector<16x64xi1>, vector<16x64xf32>
    %397 = vector.shape_cast %19 : vector<64xf32> to vector<1x64xf32>
    %398 = vector.broadcast %397 : vector<1x64xf32> to vector<16x64xf32>
    %399 = arith.mulf %396, %398 : vector<16x64xf32>
    %400 = arith.addf %391, %399 : vector<16x64xf32>
    %401 = arith.addf %379, %400 : vector<16x64xf32>
    %c0_107 = arith.constant 0 : index
    %c4_108 = arith.constant 4 : index
    %c0_109 = arith.constant 0 : index
    %c0_110 = arith.constant 0 : index
    %402 = vector.load %arg7[%c0_107, %c4_108, %c0_109, %c0_110] : memref<1x8x16x64xf32, #tpu.memory_space<vmem>>, vector<1x1x16x64xf32>
    %403 = vector.shape_cast %402 : vector<1x1x16x64xf32> to vector<16x64xf32>
    %404 = vector.shape_cast %401 : vector<16x64xf32> to vector<1x1x16x64xf32>
    tpu.vector_store %arg7[%c0_107, %c4_108, %c0_109, %c0_110], %404 {strides = array<i32>} : memref<1x8x16x64xf32, #tpu.memory_space<vmem>>, vector<1x1x16x64xf32>,
    %c0_111 = arith.constant 0 : index
    %c6 = arith.constant 6 : index
    %c0_112 = arith.constant 0 : index
    %c0_113 = arith.constant 0 : index
    %405 = vector.load %arg2[%c0_111, %c6, %c0_112, %c0_113] : memref<1x8x16x64xf32, #tpu.memory_space<vmem>>, vector<1x1x16x64xf32>
    %406 = vector.shape_cast %405 : vector<1x1x16x64xf32> to vector<16x64xf32>
    %407 = vector.shape_cast %11 : vector<64xf32> to vector<1x64xf32>
    %408 = vector.broadcast %407 : vector<1x64xf32> to vector<16x64xf32>
    %409 = arith.mulf %333, %408 : vector<16x64xf32>
    %c1_i32_114 = arith.constant 1 : i32
    %410 = tpu.dynamic_rotate %333 by %c1_i32_114 dim 0 : vector<16x64xf32>, i32 -> vector<16x64xf32>
    %cst_115 = arith.constant 0.000000e+00 : f32
    %411 = vector.shape_cast %24 : vector<16x1xi1> to vector<16x1xi1>
    %412 = vector.broadcast %411 : vector<16x1xi1> to vector<16x64xi1>
    %413 = vector.broadcast %cst_115 : f32 to vector<16x64xf32>
    %414 = arith.select %412, %410, %413 : vector<16x64xi1>, vector<16x64xf32>
    %415 = vector.shape_cast %9 : vector<64xf32> to vector<1x64xf32>
    %416 = vector.broadcast %415 : vector<1x64xf32> to vector<16x64xf32>
    %417 = arith.mulf %414, %416 : vector<16x64xf32>
    %418 = arith.addf %409, %417 : vector<16x64xf32>
    %c15_i32_116 = arith.constant 15 : i32
    %419 = tpu.dynamic_rotate %333 by %c15_i32_116 dim 0 : vector<16x64xf32>, i32 -> vector<16x64xf32>
    %cst_117 = arith.constant 0.000000e+00 : f32
    %420 = vector.shape_cast %26 : vector<16x1xi1> to vector<16x1xi1>
    %421 = vector.broadcast %420 : vector<16x1xi1> to vector<16x64xi1>
    %422 = vector.broadcast %cst_117 : f32 to vector<16x64xf32>
    %423 = arith.select %421, %419, %422 : vector<16x64xi1>, vector<16x64xf32>
    %424 = vector.shape_cast %13 : vector<64xf32> to vector<1x64xf32>
    %425 = vector.broadcast %424 : vector<1x64xf32> to vector<16x64xf32>
    %426 = arith.mulf %423, %425 : vector<16x64xf32>
    %427 = arith.addf %418, %426 : vector<16x64xf32>
    %428 = vector.shape_cast %21 : vector<64xf32> to vector<1x64xf32>
    %429 = vector.broadcast %428 : vector<1x64xf32> to vector<16x64xf32>
    %430 = arith.addf %429, %427 : vector<16x64xf32>
    %431 = vector.shape_cast %5 : vector<64xf32> to vector<1x64xf32>
    %432 = vector.broadcast %431 : vector<1x64xf32> to vector<16x64xf32>
    %433 = arith.mulf %260, %432 : vector<16x64xf32>
    %c1_i32_118 = arith.constant 1 : i32
    %434 = tpu.dynamic_rotate %260 by %c1_i32_118 dim 0 : vector<16x64xf32>, i32 -> vector<16x64xf32>
    %cst_119 = arith.constant 0.000000e+00 : f32
    %435 = vector.shape_cast %24 : vector<16x1xi1> to vector<16x1xi1>
    %436 = vector.broadcast %435 : vector<16x1xi1> to vector<16x64xi1>
    %437 = vector.broadcast %cst_119 : f32 to vector<16x64xf32>
    %438 = arith.select %436, %434, %437 : vector<16x64xi1>, vector<16x64xf32>
    %439 = vector.shape_cast %3 : vector<64xf32> to vector<1x64xf32>
    %440 = vector.broadcast %439 : vector<1x64xf32> to vector<16x64xf32>
    %441 = arith.mulf %438, %440 : vector<16x64xf32>
    %442 = arith.addf %433, %441 : vector<16x64xf32>
    %c15_i32_120 = arith.constant 15 : i32
    %443 = tpu.dynamic_rotate %260 by %c15_i32_120 dim 0 : vector<16x64xf32>, i32 -> vector<16x64xf32>
    %cst_121 = arith.constant 0.000000e+00 : f32
    %444 = vector.shape_cast %26 : vector<16x1xi1> to vector<16x1xi1>
    %445 = vector.broadcast %444 : vector<16x1xi1> to vector<16x64xi1>
    %446 = vector.broadcast %cst_121 : f32 to vector<16x64xf32>
    %447 = arith.select %445, %443, %446 : vector<16x64xi1>, vector<16x64xf32>
    %448 = vector.shape_cast %7 : vector<64xf32> to vector<1x64xf32>
    %449 = vector.broadcast %448 : vector<1x64xf32> to vector<16x64xf32>
    %450 = arith.mulf %447, %449 : vector<16x64xf32>
    %451 = arith.addf %442, %450 : vector<16x64xf32>
    %452 = arith.addf %430, %451 : vector<16x64xf32>
    %453 = vector.shape_cast %17 : vector<64xf32> to vector<1x64xf32>
    %454 = vector.broadcast %453 : vector<1x64xf32> to vector<16x64xf32>
    %455 = arith.mulf %406, %454 : vector<16x64xf32>
    %c1_i32_122 = arith.constant 1 : i32
    %456 = tpu.dynamic_rotate %406 by %c1_i32_122 dim 0 : vector<16x64xf32>, i32 -> vector<16x64xf32>
    %cst_123 = arith.constant 0.000000e+00 : f32
    %457 = vector.shape_cast %24 : vector<16x1xi1> to vector<16x1xi1>
    %458 = vector.broadcast %457 : vector<16x1xi1> to vector<16x64xi1>
    %459 = vector.broadcast %cst_123 : f32 to vector<16x64xf32>
    %460 = arith.select %458, %456, %459 : vector<16x64xi1>, vector<16x64xf32>
    %461 = vector.shape_cast %15 : vector<64xf32> to vector<1x64xf32>
    %462 = vector.broadcast %461 : vector<1x64xf32> to vector<16x64xf32>
    %463 = arith.mulf %460, %462 : vector<16x64xf32>
    %464 = arith.addf %455, %463 : vector<16x64xf32>
    %c15_i32_124 = arith.constant 15 : i32
    %465 = tpu.dynamic_rotate %406 by %c15_i32_124 dim 0 : vector<16x64xf32>, i32 -> vector<16x64xf32>
    %cst_125 = arith.constant 0.000000e+00 : f32
    %466 = vector.shape_cast %26 : vector<16x1xi1> to vector<16x1xi1>
    %467 = vector.broadcast %466 : vector<16x1xi1> to vector<16x64xi1>
    %468 = vector.broadcast %cst_125 : f32 to vector<16x64xf32>
    %469 = arith.select %467, %465, %468 : vector<16x64xi1>, vector<16x64xf32>
    %470 = vector.shape_cast %19 : vector<64xf32> to vector<1x64xf32>
    %471 = vector.broadcast %470 : vector<1x64xf32> to vector<16x64xf32>
    %472 = arith.mulf %469, %471 : vector<16x64xf32>
    %473 = arith.addf %464, %472 : vector<16x64xf32>
    %474 = arith.addf %452, %473 : vector<16x64xf32>
    %c0_126 = arith.constant 0 : index
    %c5_127 = arith.constant 5 : index
    %c0_128 = arith.constant 0 : index
    %c0_129 = arith.constant 0 : index
    %475 = vector.load %arg7[%c0_126, %c5_127, %c0_128, %c0_129] : memref<1x8x16x64xf32, #tpu.memory_space<vmem>>, vector<1x1x16x64xf32>
    %476 = vector.shape_cast %475 : vector<1x1x16x64xf32> to vector<16x64xf32>
    %477 = vector.shape_cast %474 : vector<16x64xf32> to vector<1x1x16x64xf32>
    tpu.vector_store %arg7[%c0_126, %c5_127, %c0_128, %c0_129], %477 {strides = array<i32>} : memref<1x8x16x64xf32, #tpu.memory_space<vmem>>, vector<1x1x16x64xf32>,
    %c0_130 = arith.constant 0 : index
    %c7 = arith.constant 7 : index
    %c0_131 = arith.constant 0 : index
    %c0_132 = arith.constant 0 : index
    %478 = vector.load %arg2[%c0_130, %c7, %c0_131, %c0_132] : memref<1x8x16x64xf32, #tpu.memory_space<vmem>>, vector<1x1x16x64xf32>
    %479 = vector.shape_cast %478 : vector<1x1x16x64xf32> to vector<16x64xf32>
    %480 = vector.shape_cast %11 : vector<64xf32> to vector<1x64xf32>
    %481 = vector.broadcast %480 : vector<1x64xf32> to vector<16x64xf32>
    %482 = arith.mulf %406, %481 : vector<16x64xf32>
    %c1_i32_133 = arith.constant 1 : i32
    %483 = tpu.dynamic_rotate %406 by %c1_i32_133 dim 0 : vector<16x64xf32>, i32 -> vector<16x64xf32>
    %cst_134 = arith.constant 0.000000e+00 : f32
    %484 = vector.shape_cast %24 : vector<16x1xi1> to vector<16x1xi1>
    %485 = vector.broadcast %484 : vector<16x1xi1> to vector<16x64xi1>
    %486 = vector.broadcast %cst_134 : f32 to vector<16x64xf32>
    %487 = arith.select %485, %483, %486 : vector<16x64xi1>, vector<16x64xf32>
    %488 = vector.shape_cast %9 : vector<64xf32> to vector<1x64xf32>
    %489 = vector.broadcast %488 : vector<1x64xf32> to vector<16x64xf32>
    %490 = arith.mulf %487, %489 : vector<16x64xf32>
    %491 = arith.addf %482, %490 : vector<16x64xf32>
    %c15_i32_135 = arith.constant 15 : i32
    %492 = tpu.dynamic_rotate %406 by %c15_i32_135 dim 0 : vector<16x64xf32>, i32 -> vector<16x64xf32>
    %cst_136 = arith.constant 0.000000e+00 : f32
    %493 = vector.shape_cast %26 : vector<16x1xi1> to vector<16x1xi1>
    %494 = vector.broadcast %493 : vector<16x1xi1> to vector<16x64xi1>
    %495 = vector.broadcast %cst_136 : f32 to vector<16x64xf32>
    %496 = arith.select %494, %492, %495 : vector<16x64xi1>, vector<16x64xf32>
    %497 = vector.shape_cast %13 : vector<64xf32> to vector<1x64xf32>
    %498 = vector.broadcast %497 : vector<1x64xf32> to vector<16x64xf32>
    %499 = arith.mulf %496, %498 : vector<16x64xf32>
    %500 = arith.addf %491, %499 : vector<16x64xf32>
    %501 = vector.shape_cast %21 : vector<64xf32> to vector<1x64xf32>
    %502 = vector.broadcast %501 : vector<1x64xf32> to vector<16x64xf32>
    %503 = arith.addf %502, %500 : vector<16x64xf32>
    %504 = vector.shape_cast %5 : vector<64xf32> to vector<1x64xf32>
    %505 = vector.broadcast %504 : vector<1x64xf32> to vector<16x64xf32>
    %506 = arith.mulf %333, %505 : vector<16x64xf32>
    %c1_i32_137 = arith.constant 1 : i32
    %507 = tpu.dynamic_rotate %333 by %c1_i32_137 dim 0 : vector<16x64xf32>, i32 -> vector<16x64xf32>
    %cst_138 = arith.constant 0.000000e+00 : f32
    %508 = vector.shape_cast %24 : vector<16x1xi1> to vector<16x1xi1>
    %509 = vector.broadcast %508 : vector<16x1xi1> to vector<16x64xi1>
    %510 = vector.broadcast %cst_138 : f32 to vector<16x64xf32>
    %511 = arith.select %509, %507, %510 : vector<16x64xi1>, vector<16x64xf32>
    %512 = vector.shape_cast %3 : vector<64xf32> to vector<1x64xf32>
    %513 = vector.broadcast %512 : vector<1x64xf32> to vector<16x64xf32>
    %514 = arith.mulf %511, %513 : vector<16x64xf32>
    %515 = arith.addf %506, %514 : vector<16x64xf32>
    %c15_i32_139 = arith.constant 15 : i32
    %516 = tpu.dynamic_rotate %333 by %c15_i32_139 dim 0 : vector<16x64xf32>, i32 -> vector<16x64xf32>
    %cst_140 = arith.constant 0.000000e+00 : f32
    %517 = vector.shape_cast %26 : vector<16x1xi1> to vector<16x1xi1>
    %518 = vector.broadcast %517 : vector<16x1xi1> to vector<16x64xi1>
    %519 = vector.broadcast %cst_140 : f32 to vector<16x64xf32>
    %520 = arith.select %518, %516, %519 : vector<16x64xi1>, vector<16x64xf32>
    %521 = vector.shape_cast %7 : vector<64xf32> to vector<1x64xf32>
    %522 = vector.broadcast %521 : vector<1x64xf32> to vector<16x64xf32>
    %523 = arith.mulf %520, %522 : vector<16x64xf32>
    %524 = arith.addf %515, %523 : vector<16x64xf32>
    %525 = arith.addf %503, %524 : vector<16x64xf32>
    %526 = vector.shape_cast %17 : vector<64xf32> to vector<1x64xf32>
    %527 = vector.broadcast %526 : vector<1x64xf32> to vector<16x64xf32>
    %528 = arith.mulf %479, %527 : vector<16x64xf32>
    %c1_i32_141 = arith.constant 1 : i32
    %529 = tpu.dynamic_rotate %479 by %c1_i32_141 dim 0 : vector<16x64xf32>, i32 -> vector<16x64xf32>
    %cst_142 = arith.constant 0.000000e+00 : f32
    %530 = vector.shape_cast %24 : vector<16x1xi1> to vector<16x1xi1>
    %531 = vector.broadcast %530 : vector<16x1xi1> to vector<16x64xi1>
    %532 = vector.broadcast %cst_142 : f32 to vector<16x64xf32>
    %533 = arith.select %531, %529, %532 : vector<16x64xi1>, vector<16x64xf32>
    %534 = vector.shape_cast %15 : vector<64xf32> to vector<1x64xf32>
    %535 = vector.broadcast %534 : vector<1x64xf32> to vector<16x64xf32>
    %536 = arith.mulf %533, %535 : vector<16x64xf32>
    %537 = arith.addf %528, %536 : vector<16x64xf32>
    %c15_i32_143 = arith.constant 15 : i32
    %538 = tpu.dynamic_rotate %479 by %c15_i32_143 dim 0 : vector<16x64xf32>, i32 -> vector<16x64xf32>
    %cst_144 = arith.constant 0.000000e+00 : f32
    %539 = vector.shape_cast %26 : vector<16x1xi1> to vector<16x1xi1>
    %540 = vector.broadcast %539 : vector<16x1xi1> to vector<16x64xi1>
    %541 = vector.broadcast %cst_144 : f32 to vector<16x64xf32>
    %542 = arith.select %540, %538, %541 : vector<16x64xi1>, vector<16x64xf32>
    %543 = vector.shape_cast %19 : vector<64xf32> to vector<1x64xf32>
    %544 = vector.broadcast %543 : vector<1x64xf32> to vector<16x64xf32>
    %545 = arith.mulf %542, %544 : vector<16x64xf32>
    %546 = arith.addf %537, %545 : vector<16x64xf32>
    %547 = arith.addf %525, %546 : vector<16x64xf32>
    %c0_145 = arith.constant 0 : index
    %c6_146 = arith.constant 6 : index
    %c0_147 = arith.constant 0 : index
    %c0_148 = arith.constant 0 : index
    %548 = vector.load %arg7[%c0_145, %c6_146, %c0_147, %c0_148] : memref<1x8x16x64xf32, #tpu.memory_space<vmem>>, vector<1x1x16x64xf32>
    %549 = vector.shape_cast %548 : vector<1x1x16x64xf32> to vector<16x64xf32>
    %550 = vector.shape_cast %547 : vector<16x64xf32> to vector<1x1x16x64xf32>
    tpu.vector_store %arg7[%c0_145, %c6_146, %c0_147, %c0_148], %550 {strides = array<i32>} : memref<1x8x16x64xf32, #tpu.memory_space<vmem>>, vector<1x1x16x64xf32>,
    %551 = vector.shape_cast %11 : vector<64xf32> to vector<1x64xf32>
    %552 = vector.broadcast %551 : vector<1x64xf32> to vector<16x64xf32>
    %553 = arith.mulf %479, %552 : vector<16x64xf32>
    %c1_i32_149 = arith.constant 1 : i32
    %554 = tpu.dynamic_rotate %479 by %c1_i32_149 dim 0 : vector<16x64xf32>, i32 -> vector<16x64xf32>
    %cst_150 = arith.constant 0.000000e+00 : f32
    %555 = vector.shape_cast %24 : vector<16x1xi1> to vector<16x1xi1>
    %556 = vector.broadcast %555 : vector<16x1xi1> to vector<16x64xi1>
    %557 = vector.broadcast %cst_150 : f32 to vector<16x64xf32>
    %558 = arith.select %556, %554, %557 : vector<16x64xi1>, vector<16x64xf32>
    %559 = vector.shape_cast %9 : vector<64xf32> to vector<1x64xf32>
    %560 = vector.broadcast %559 : vector<1x64xf32> to vector<16x64xf32>
    %561 = arith.mulf %558, %560 : vector<16x64xf32>
    %562 = arith.addf %553, %561 : vector<16x64xf32>
    %c15_i32_151 = arith.constant 15 : i32
    %563 = tpu.dynamic_rotate %479 by %c15_i32_151 dim 0 : vector<16x64xf32>, i32 -> vector<16x64xf32>
    %cst_152 = arith.constant 0.000000e+00 : f32
    %564 = vector.shape_cast %26 : vector<16x1xi1> to vector<16x1xi1>
    %565 = vector.broadcast %564 : vector<16x1xi1> to vector<16x64xi1>
    %566 = vector.broadcast %cst_152 : f32 to vector<16x64xf32>
    %567 = arith.select %565, %563, %566 : vector<16x64xi1>, vector<16x64xf32>
    %568 = vector.shape_cast %13 : vector<64xf32> to vector<1x64xf32>
    %569 = vector.broadcast %568 : vector<1x64xf32> to vector<16x64xf32>
    %570 = arith.mulf %567, %569 : vector<16x64xf32>
    %571 = arith.addf %562, %570 : vector<16x64xf32>
    %572 = vector.shape_cast %21 : vector<64xf32> to vector<1x64xf32>
    %573 = vector.broadcast %572 : vector<1x64xf32> to vector<16x64xf32>
    %574 = arith.addf %573, %571 : vector<16x64xf32>
    %575 = vector.shape_cast %5 : vector<64xf32> to vector<1x64xf32>
    %576 = vector.broadcast %575 : vector<1x64xf32> to vector<16x64xf32>
    %577 = arith.mulf %406, %576 : vector<16x64xf32>
    %c1_i32_153 = arith.constant 1 : i32
    %578 = tpu.dynamic_rotate %406 by %c1_i32_153 dim 0 : vector<16x64xf32>, i32 -> vector<16x64xf32>
    %cst_154 = arith.constant 0.000000e+00 : f32
    %579 = vector.shape_cast %24 : vector<16x1xi1> to vector<16x1xi1>
    %580 = vector.broadcast %579 : vector<16x1xi1> to vector<16x64xi1>
    %581 = vector.broadcast %cst_154 : f32 to vector<16x64xf32>
    %582 = arith.select %580, %578, %581 : vector<16x64xi1>, vector<16x64xf32>
    %583 = vector.shape_cast %3 : vector<64xf32> to vector<1x64xf32>
    %584 = vector.broadcast %583 : vector<1x64xf32> to vector<16x64xf32>
    %585 = arith.mulf %582, %584 : vector<16x64xf32>
    %586 = arith.addf %577, %585 : vector<16x64xf32>
    %c15_i32_155 = arith.constant 15 : i32
    %587 = tpu.dynamic_rotate %406 by %c15_i32_155 dim 0 : vector<16x64xf32>, i32 -> vector<16x64xf32>
    %cst_156 = arith.constant 0.000000e+00 : f32
    %588 = vector.shape_cast %26 : vector<16x1xi1> to vector<16x1xi1>
    %589 = vector.broadcast %588 : vector<16x1xi1> to vector<16x64xi1>
    %590 = vector.broadcast %cst_156 : f32 to vector<16x64xf32>
    %591 = arith.select %589, %587, %590 : vector<16x64xi1>, vector<16x64xf32>
    %592 = vector.shape_cast %7 : vector<64xf32> to vector<1x64xf32>
    %593 = vector.broadcast %592 : vector<1x64xf32> to vector<16x64xf32>
    %594 = arith.mulf %591, %593 : vector<16x64xf32>
    %595 = arith.addf %586, %594 : vector<16x64xf32>
    %596 = arith.addf %574, %595 : vector<16x64xf32>
    %597 = vector.shape_cast %17 : vector<64xf32> to vector<1x64xf32>
    %598 = vector.broadcast %597 : vector<1x64xf32> to vector<16x64xf32>
    %599 = arith.mulf %37, %598 : vector<16x64xf32>
    %c1_i32_157 = arith.constant 1 : i32
    %600 = tpu.dynamic_rotate %37 by %c1_i32_157 dim 0 : vector<16x64xf32>, i32 -> vector<16x64xf32>
    %cst_158 = arith.constant 0.000000e+00 : f32
    %601 = vector.shape_cast %24 : vector<16x1xi1> to vector<16x1xi1>
    %602 = vector.broadcast %601 : vector<16x1xi1> to vector<16x64xi1>
    %603 = vector.broadcast %cst_158 : f32 to vector<16x64xf32>
    %604 = arith.select %602, %600, %603 : vector<16x64xi1>, vector<16x64xf32>
    %605 = vector.shape_cast %15 : vector<64xf32> to vector<1x64xf32>
    %606 = vector.broadcast %605 : vector<1x64xf32> to vector<16x64xf32>
    %607 = arith.mulf %604, %606 : vector<16x64xf32>
    %608 = arith.addf %599, %607 : vector<16x64xf32>
    %c15_i32_159 = arith.constant 15 : i32
    %609 = tpu.dynamic_rotate %37 by %c15_i32_159 dim 0 : vector<16x64xf32>, i32 -> vector<16x64xf32>
    %cst_160 = arith.constant 0.000000e+00 : f32
    %610 = vector.shape_cast %26 : vector<16x1xi1> to vector<16x1xi1>
    %611 = vector.broadcast %610 : vector<16x1xi1> to vector<16x64xi1>
    %612 = vector.broadcast %cst_160 : f32 to vector<16x64xf32>
    %613 = arith.select %611, %609, %612 : vector<16x64xi1>, vector<16x64xf32>
    %614 = vector.shape_cast %19 : vector<64xf32> to vector<1x64xf32>
    %615 = vector.broadcast %614 : vector<1x64xf32> to vector<16x64xf32>
    %616 = arith.mulf %613, %615 : vector<16x64xf32>
    %617 = arith.addf %608, %616 : vector<16x64xf32>
    %618 = arith.addf %596, %617 : vector<16x64xf32>
    %c0_161 = arith.constant 0 : index
    %c7_162 = arith.constant 7 : index
    %c0_163 = arith.constant 0 : index
    %c0_164 = arith.constant 0 : index
    %619 = vector.load %arg7[%c0_161, %c7_162, %c0_163, %c0_164] : memref<1x8x16x64xf32, #tpu.memory_space<vmem>>, vector<1x1x16x64xf32>
    %620 = vector.shape_cast %619 : vector<1x1x16x64xf32> to vector<16x64xf32>
    %621 = vector.shape_cast %618 : vector<16x64xf32> to vector<1x1x16x64xf32>
    tpu.vector_store %arg7[%c0_161, %c7_162, %c0_163, %c0_164], %621 {strides = array<i32>} : memref<1x8x16x64xf32, #tpu.memory_space<vmem>>, vector<1x1x16x64xf32>,
    return
  }
  func.func @transform_0(%arg0: i32, %arg1: i32) -> (i32, i32, i32, i32) {
    %c0_i32 = arith.constant 0 : i32
    %c0_i32_0 = arith.constant 0 : i32
    %c0_i32_1 = arith.constant 0 : i32
    return %arg0, %arg1, %c0_i32, %c0_i32_0 : i32, i32, i32, i32
  }
  func.func @transform_1(%arg0: i32, %arg1: i32) -> (i32, i32, i32, i32) {
    %c8_i32 = arith.constant 8 : i32
    %0 = arith.muli %arg1, %c8_i32 : i32
    %c1_i32 = arith.constant 1 : i32
    %1 = arith.subi %0, %c1_i32 : i32
    %c0_i32 = arith.constant 0 : i32
    %2 = arith.maxsi %1, %c0_i32 : i32
    %c0_i32_0 = arith.constant 0 : i32
    %c0_i32_1 = arith.constant 0 : i32
    %c0_i32_2 = arith.constant 0 : i32
    return %arg0, %2, %c0_i32_0, %c0_i32_1 : i32, i32, i32, i32
  }
  func.func @transform_2(%arg0: i32, %arg1: i32) -> (i32, i32, i32, i32) {
    %c8_i32 = arith.constant 8 : i32
    %0 = arith.muli %arg1, %c8_i32 : i32
    %c8_i32_0 = arith.constant 8 : i32
    %1 = arith.addi %0, %c8_i32_0 : i32
    %c15_i32 = arith.constant 15 : i32
    %2 = arith.minsi %1, %c15_i32 : i32
    %c0_i32 = arith.constant 0 : i32
    %c0_i32_1 = arith.constant 0 : i32
    %c0_i32_2 = arith.constant 0 : i32
    return %arg0, %2, %c0_i32, %c0_i32_1 : i32, i32, i32, i32
  }
  func.func @transform_3(%arg0: i32, %arg1: i32) -> (i32, i32) {
    %c0_i32 = arith.constant 0 : i32
    %c0_i32_0 = arith.constant 0 : i32
    %c0_i32_1 = arith.constant 0 : i32
    return %c0_i32, %c0_i32_0 : i32, i32
  }
  func.func @transform_4(%arg0: i32, %arg1: i32) -> (i32, i32) {
    %c0_i32 = arith.constant 0 : i32
    %c0_i32_0 = arith.constant 0 : i32
    %c0_i32_1 = arith.constant 0 : i32
    return %c0_i32, %c0_i32_0 : i32, i32
  }
  func.func @transform_5(%arg0: i32, %arg1: i32) -> (i32, i32, i32, i32) {
    %c0_i32 = arith.constant 0 : i32
    %c0_i32_0 = arith.constant 0 : i32
    %c0_i32_1 = arith.constant 0 : i32
    return %arg0, %arg1, %c0_i32, %c0_i32_0 : i32, i32, i32, i32
  }
}

</mosaic_0001>

<llo_original>
// kernel: tpu_custom_call.1
$region0: #{tpu_custom_call.1}
  #allocation0 [shape = 'u32[]', space=smem, size = 0x4, offset = 0x4, fixed_abs, tag = 'smem constant byte address 0x4 - core index']
  #allocation1 [shape = 'u32[144,128]{1,0:T(1,128)}', space=vmem, size = 0x12000, scoped, tag = 'internal scratch']
  %s0 = inlined_call_operand.hbm [shape: f32[2,16,16,64], index: 0, kind: input, shape index: {}]
  %s1 = inlined_call_operand.hbm [shape: f32[2,16,16,64], index: 1, kind: input, shape index: {}]
  %s2 = inlined_call_operand.hbm [shape: f32[2,16,16,64], index: 2, kind: input, shape index: {}]
  %s3 = inlined_call_operand.hbm [shape: f32[9,64], index: 3, kind: input, shape index: {}]
  %s4 = inlined_call_operand.vmem [shape: f32[1,64], index: 4, kind: input, shape index: {}]
  %s5 = inlined_call_operand.hbm [shape: f32[2,16,16,64], index: 5, kind: output, shape index: {}]
  %s6 = sld [smem:[#allocation0]]
  $region69: #{tpu_custom_call.1} parent=0
    _
  %s8 = ssub.s32 1, %s6
  %s9 = scalar_select 0, %s8, %s6
  $region1: #{tpu_custom_call.1} parent=0
    #allocation2 [shape = 'u8[131072]{0}', space=vmem, size = 0x20000, scoped, tag = 'input window, operand 0']
    #allocation3 [shape = 's32[2]{0}', space=sflag, size = 0x8, scoped, tag = 'scoped memory for tpu_custom_call.1']
    #allocation4 [shape = 's32[2]{0}', space=sflag, size = 0x8, scoped, tag = 'scoped memory for tpu_custom_call.1']
    #allocation5 [shape = 'u8[16384]{0}', space=vmem, size = 0x4000, scoped, tag = 'input window, operand 1']
    #allocation6 [shape = 's32[2]{0}', space=sflag, size = 0x8, scoped, tag = 'scoped memory for tpu_custom_call.1']
    #allocation7 [shape = 'u8[16384]{0}', space=vmem, size = 0x4000, scoped, tag = 'input window, operand 2']
    #allocation8 [shape = 'u8[8192]{0}', space=vmem, size = 0x2000, scoped, tag = 'input window, operand 3, single buffered']
    #allocation9 [shape = 's32[1]{0}', space=sflag, size = 0x4, scoped, tag = 'scoped memory for tpu_custom_call.1']
    #allocation10 [shape = 'u8[131072]{0}', space=vmem, size = 0x20000, scoped, tag = 'output window, operand 0']
    %10 = vsyncpa [#allocation3], 0
    %s11 = scalar_lea.sflag [#allocation3], 1
    %12 = vsyncpa %s11, 0
    %13 = vsyncpa [#allocation6], 0
    %s14 = scalar_lea.sflag [#allocation6], 1
    %15 = vsyncpa %s14, 0
    %16 = vsyncpa [#allocation9], 0
    %17 = vsyncpa [#allocation4], 0
    %s18 = scalar_lea.sflag [#allocation4], 1
    %19 = vsyncpa %s18, 0
    loop: start=0, step=1, limit=6
    $region2: #{tpu_custom_call.1} parent=1 // loop_pre_header
      _
    $region3: #{tpu_custom_call.1} parent=1 // loop_header
      %s21 = sphi 0, %s25
      %p22 = scmp.ge.s32.totalorder %s21, 6
      %s28 = sphi 0, %s40
      %s29 = sphi 0, %s36
      %s30 = sphi 0, %s28
      %s31 = sphi 0, %s29
      %s32 = sphi 0, %s30
      %s33 = sphi 0, %s31
      %s45 = sphi 0, %s47
      %s48 = sphi 0, %s45
      %s49 = sphi 0, %s48
      %s65 = sphi 0, %s49
      %s81 = sphi 0, %s83
      %s84 = sphi 0, %s81
      %s85 = sphi 0, %s84
      %s101 = sphi 0, %s85
      %s117 = sphi 0, %s119
      %s120 = sphi 0, %s117
      %s121 = sphi 0, %s120
      %s137 = sphi 0, %s121
      %s141 = sphi 0, %s141
      %s143 = sphi 0, %s141
      %s144 = sphi 0, %s143
      %s158 = sphi 0, %s144
      %s162 = sphi 0, %s162
      %s164 = sphi 0, %s162
      %s165 = sphi 0, %s164
      %s179 = sphi 0, %s165
      %s187 = sphi 0, %s189
      %s190 = sphi 0, %s187
      %s191 = sphi 0, %s190
      %s207 = sphi 0, %s191
    $region4: #{tpu_custom_call.1} parent=1 // loop_header_branch
      %24 = sbr.rel (%p22) target = $region8
    $region5: #{tpu_custom_call.1} parent=1 // loop_body
      %s26 = ssub.s32 %s21, 1
      %s27 = ssub.s32 %s21, 2
      %s34 = sadd.s32 1, %s29
      %p35 = scmp.ge.s32.totalorder %s34, 2
      %s36 = scalar_select %p35, 0, %s34
      %s37 = sadd.s32 1, %s28
      %s38 = scalar_select %p35, %s37, %s28
      %p39 = scmp.ge.s32.totalorder %s38, 2
      %s40 = scalar_select %p39, 0, %s38
      %s41 = ssub.s32 %s28, %s40
      %s42 = ssub.s32 %s29, %s36
      %s43 = sor.u32 %s41, %s42
      %p44 = scmp.eq.s32.totalorder %s43, 0
      %s46 = sadd.s32 %s45, 1
      %s47 = scalar_select %p44, %s45, %s46
      %p50 = pneg %p44
      %p51 = scmp.eq.s32.totalorder %s21, 3
      %p52 = por %p50, %p51
      %p53 = scmp.ne.s32.totalorder %s45, %s48
      %p54 = scmp.eq.s32.totalorder %s21, 0
      %p55 = por %p53, %p54
      %p56 = scmp.ne.s32.totalorder %s45, %s48
      %p57 = scmp.eq.s32.totalorder %s26, 3
      %p58 = por %p56, %p57
      %p59 = scmp.ne.s32.totalorder %s48, %s49
      %p60 = scmp.eq.s32.totalorder %s26, 0
      %p61 = por %p59, %p60
      %p62 = scmp.ne.s32.totalorder %s48, %s49
      %p63 = scmp.eq.s32.totalorder %s27, 3
      %p64 = por %p62, %p63
      %p66 = scmp.ne.s32.totalorder %s49, %s65
      %p67 = scmp.eq.s32.totalorder %s27, 0
      %p68 = por %p66, %p67
      %s69 = smul.u32 %s29, 8
      %s70 = ssub.s32 %s69, 1
      %p71 = scmp.gt.s32.totalorder %s70, 0
      %s72 = scalar_select %p71, %s70, 0
      %s73 = smul.u32 %s36, 8
      %s74 = ssub.s32 %s73, 1
      %p75 = scmp.gt.s32.totalorder %s74, 0
      %s76 = scalar_select %p75, %s74, 0
      %s77 = ssub.s32 %s28, %s40
      %s78 = ssub.s32 %s72, %s76
      %s79 = sor.u32 %s77, %s78
      %p80 = scmp.eq.s32.totalorder %s79, 0
      %s82 = sadd.s32 %s81, 1
      %s83 = scalar_select %p80, %s81, %s82
      %p86 = pneg %p80
      %p87 = scmp.eq.s32.totalorder %s21, 3
      %p88 = por %p86, %p87
      %p89 = scmp.ne.s32.totalorder %s81, %s84
      %p90 = scmp.eq.s32.totalorder %s21, 0
      %p91 = por %p89, %p90
      %p92 = scmp.ne.s32.totalorder %s81, %s84
      %p93 = scmp.eq.s32.totalorder %s26, 3
      %p94 = por %p92, %p93
      %p95 = scmp.ne.s32.totalorder %s84, %s85
      %p96 = scmp.eq.s32.totalorder %s26, 0
      %p97 = por %p95, %p96
      %p98 = scmp.ne.s32.totalorder %s84, %s85
      %p99 = scmp.eq.s32.totalorder %s27, 3
      %p100 = por %p98, %p99
      %p102 = scmp.ne.s32.totalorder %s85, %s101
      %p103 = scmp.eq.s32.totalorder %s27, 0
      %p104 = por %p102, %p103
      %s105 = smul.u32 %s29, 8
      %s106 = sadd.s32 %s105, 8
      %p107 = scmp.lt.s32.totalorder %s106, 15
      %s108 = scalar_select %p107, %s106, 15
      %s109 = smul.u32 %s36, 8
      %s110 = sadd.s32 %s109, 8
      %p111 = scmp.lt.s32.totalorder %s110, 15
      %s112 = scalar_select %p111, %s110, 15
      %s113 = ssub.s32 %s28, %s40
      %s114 = ssub.s32 %s108, %s112
      %s115 = sor.u32 %s113, %s114
      %p116 = scmp.eq.s32.totalorder %s115, 0
      %s118 = sadd.s32 %s117, 1
      %s119 = scalar_select %p116, %s117, %s118
      %p122 = pneg %p116
      %p123 = scmp.eq.s32.totalorder %s21, 3
      %p124 = por %p122, %p123
      %p125 = scmp.ne.s32.totalorder %s117, %s120
      %p126 = scmp.eq.s32.totalorder %s21, 0
      %p127 = por %p125, %p126
      %p128 = scmp.ne.s32.totalorder %s117, %s120
      %p129 = scmp.eq.s32.totalorder %s26, 3
      %p130 = por %p128, %p129
      %p131 = scmp.ne.s32.totalorder %s120, %s121
      %p132 = scmp.eq.s32.totalorder %s26, 0
      %p133 = por %p131, %p132
      %p134 = scmp.ne.s32.totalorder %s120, %s121
      %p135 = scmp.eq.s32.totalorder %s27, 3
      %p136 = por %p134, %p135
      %p138 = scmp.ne.s32.totalorder %s121, %s137
      %p139 = scmp.eq.s32.totalorder %s27, 0
      %p140 = por %p138, %p139
      %s142 = sadd.s32 %s141, 1
      %p145 = scmp.eq.s32.totalorder %s21, 3
      %p146 = scmp.ne.s32.totalorder %s141, %s143
      %p147 = scmp.eq.s32.totalorder %s21, 0
      %p148 = por %p146, %p147
      %p149 = scmp.ne.s32.totalorder %s141, %s143
      %p150 = scmp.eq.s32.totalorder %s26, 3
      %p151 = por %p149, %p150
      %p152 = scmp.ne.s32.totalorder %s143, %s144
      %p153 = scmp.eq.s32.totalorder %s26, 0
      %p154 = por %p152, %p153
      %p155 = scmp.ne.s32.totalorder %s143, %s144
      %p156 = scmp.eq.s32.totalorder %s27, 3
      %p157 = por %p155, %p156
      %p159 = scmp.ne.s32.totalorder %s144, %s158
      %p160 = scmp.eq.s32.totalorder %s27, 0
      %p161 = por %p159, %p160
      %s163 = sadd.s32 %s162, 1
      %p166 = scmp.eq.s32.totalorder %s21, 3
      %p167 = scmp.ne.s32.totalorder %s162, %s164
      %p168 = scmp.eq.s32.totalorder %s21, 0
      %p169 = por %p167, %p168
      %p170 = scmp.ne.s32.totalorder %s162, %s164
      %p171 = scmp.eq.s32.totalorder %s26, 3
      %p172 = por %p170, %p171
      %p173 = scmp.ne.s32.totalorder %s164, %s165
      %p174 = scmp.eq.s32.totalorder %s26, 0
      %p175 = por %p173, %p174
      %p176 = scmp.ne.s32.totalorder %s164, %s165
      %p177 = scmp.eq.s32.totalorder %s27, 3
      %p178 = por %p176, %p177
      %p180 = scmp.ne.s32.totalorder %s165, %s179
      %p181 = scmp.eq.s32.totalorder %s27, 0
      %p182 = por %p180, %p181
      %s183 = ssub.s32 %s28, %s40
      %s184 = ssub.s32 %s29, %s36
      %s185 = sor.u32 %s183, %s184
      %p186 = scmp.eq.s32.totalorder %s185, 0
      %s188 = sadd.s32 %s187, 1
      %s189 = scalar_select %p186, %s187, %s188
      %p192 = pneg %p186
      %p193 = scmp.eq.s32.totalorder %s21, 3
      %p194 = por %p192, %p193
      %p195 = scmp.ne.s32.totalorder %s187, %s190
      %p196 = scmp.eq.s32.totalorder %s21, 0
      %p197 = por %p195, %p196
      %p198 = scmp.ne.s32.totalorder %s187, %s190
      %p199 = scmp.eq.s32.totalorder %s26, 3
      %p200 = por %p198, %p199
      %p201 = scmp.ne.s32.totalorder %s190, %s191
      %p202 = scmp.eq.s32.totalorder %s26, 0
      %p203 = por %p201, %p202
      %p204 = scmp.ne.s32.totalorder %s190, %s191
      %p205 = scmp.eq.s32.totalorder %s27, 3
      %p206 = por %p204, %p205
      %p208 = scmp.ne.s32.totalorder %s191, %s207
      %p209 = scmp.eq.s32.totalorder %s27, 0
      %p210 = por %p208, %p209
      %p211 = scmp.le.s32.totalorder 1, %s21
      %p212 = scmp.lt.s32.totalorder %s21, 5
      %p213 = pnand %p211, %p212
      %p214 = pneg %p213
      // Predicated region
      $region9: #{tpu_custom_call.1} parent=5 // pred_check
        _
      $region10: #{tpu_custom_call.1} parent=5 // pred_check_branch
        %216 = sbr.rel (%p213) target = $region12
      $region11: #{tpu_custom_call.1} parent=5 // pred_region
        %s217 = ssub.s32 %s21, 1
        // Predicated region
        $region13: #{tpu_custom_call.1} parent=11 // pred_check
          %p218 = pneg %p154
        $region14: #{tpu_custom_call.1} parent=11 // pred_check_branch
          %220 = sbr.rel (%p218) target = $region16
        $region15: #{tpu_custom_call.1} parent=11 // pred_region
          %s222 = ssub.s32 256, 256
          %223 = vsyncadd [#allocation9], %s222
          %s224 = sshll.u32 [#allocation8], 4
          %s225 = int_to_ptr.vmem [resolvable:$true] %s224
          %230 = dma.hbm_to_vmem [thread:$0]  %s3, 256, %s225, [#allocation9], 128, 128, 8
        $region16: #{tpu_custom_call.1} parent=11 // pred_fallthru
          _
        // Predicated region
        $region17: #{tpu_custom_call.1} parent=11 // pred_check
          %p231 = pneg %p175
        $region18: #{tpu_custom_call.1} parent=11 // pred_check_branch
          %233 = sbr.rel (%p231) target = $region20
        $region19: #{tpu_custom_call.1} parent=11 // pred_region
          _
        $region20: #{tpu_custom_call.1} parent=11 // pred_fallthru
          _
      $region12: #{tpu_custom_call.1} parent=5 // pred_fallthru
        _
      %p234 = scmp.lt.s32.totalorder %s21, 4
      // Predicated region
      $region21: #{tpu_custom_call.1} parent=5 // pred_check
        %p235 = pneg %p234
      $region22: #{tpu_custom_call.1} parent=5 // pred_check_branch
        %237 = sbr.rel (%p235) target = $region24
      $region23: #{tpu_custom_call.1} parent=5 // pred_region
        // Predicated region
        $region25: #{tpu_custom_call.1} parent=23 // pred_check
          %p238 = pneg %p55
        $region26: #{tpu_custom_call.1} parent=23 // pred_check_branch
          %240 = sbr.rel (%p238) target = $region28
        $region27: #{tpu_custom_call.1} parent=23 // pred_region
          %s241 = sand.u32 %s45, 1
          %s242 = scalar_lea.sflag [#allocation3], %s241
          %s243 = sand.u32 %s45, 1
          %s244 = smul.addr %s243, 128
          %s245 = scalar_lea.vmem [#allocation2], %s244
          %s246 = smul.u32 8, %s29
          %s248 = ssub.s32 2048, 2048
          %249 = vsyncadd %s242, %s248
          %s250 = smul.addr %s246, 2
          %s251 = smul.addr %s28, 32
          %s252 = sadd.s32 %s250, %s251
          %s253 = smul.addr %s252, 128
          %s254 = scalar_lea.hbm %s0, %s253
          %s255 = sshll.u32 %s245, 4
          %s256 = int_to_ptr.vmem [resolvable:$true] %s255
          %261 = dma.hbm_to_vmem [thread:$0]  %s254, 2048, %s256, %s242, 128, 128, 8
        $region28: #{tpu_custom_call.1} parent=23 // pred_fallthru
          _
        // Predicated region
        $region29: #{tpu_custom_call.1} parent=23 // pred_check
          %p262 = pneg %p91
        $region30: #{tpu_custom_call.1} parent=23 // pred_check_branch
          %264 = sbr.rel (%p262) target = $region32
        $region31: #{tpu_custom_call.1} parent=23 // pred_region
          %s265 = sand.u32 %s21, 1
          %s266 = scalar_lea.sflag [#allocation6], %s265
          %s267 = sand.u32 %s81, 1
          %s268 = smul.addr %s267, 16
          %s269 = scalar_lea.vmem [#allocation5], %s268
          %s270 = smul.u32 %s29, 8
          %s271 = ssub.s32 %s270, 1
          %p272 = scmp.gt.s32.totalorder %s271, 0
          %s273 = scalar_select %p272, %s271, 0
          %s275 = ssub.s32 256, 256
          %276 = vsyncadd %s266, %s275
          %s277 = smul.addr %s273, 2
          %s278 = smul.addr %s28, 32
          %s279 = sadd.s32 %s277, %s278
          %s280 = smul.addr %s279, 128
          %s281 = scalar_lea.hbm %s1, %s280
          %s282 = sshll.u32 %s269, 4
          %s283 = int_to_ptr.vmem [resolvable:$true] %s282
          %288 = dma.hbm_to_vmem [thread:$0]  %s281, 256, %s283, %s266, 128, 128, 8
        $region32: #{tpu_custom_call.1} parent=23 // pred_fallthru
          _
        // Predicated region
        $region33: #{tpu_custom_call.1} parent=23 // pred_check
          %p289 = pneg %p127
        $region34: #{tpu_custom_call.1} parent=23 // pred_check_branch
          %291 = sbr.rel (%p289) target = $region36
        $region35: #{tpu_custom_call.1} parent=23 // pred_region
          %s292 = sand.u32 %s21, 1
          %s293 = scalar_lea.sflag [#allocation6], %s292
          %s294 = sand.u32 %s117, 1
          %s295 = smul.addr %s294, 16
          %s296 = scalar_lea.vmem [#allocation7], %s295
          %s297 = smul.u32 %s29, 8
          %s298 = sadd.s32 %s297, 8
          %p299 = scmp.lt.s32.totalorder %s298, 15
          %s300 = scalar_select %p299, %s298, 15
          %s302 = ssub.s32 256, 256
          %303 = vsyncadd %s293, %s302
          %s304 = smul.addr %s300, 2
          %s305 = smul.addr %s28, 32
          %s306 = sadd.s32 %s304, %s305
          %s307 = smul.addr %s306, 128
          %s308 = scalar_lea.hbm %s2, %s307
          %s309 = sshll.u32 %s296, 4
          %s310 = int_to_ptr.vmem [resolvable:$true] %s309
          %315 = dma.hbm_to_vmem [thread:$0]  %s308, 256, %s310, %s293, 128, 128, 8
        $region36: #{tpu_custom_call.1} parent=23 // pred_fallthru
          _
      $region24: #{tpu_custom_call.1} parent=5 // pred_fallthru
        _
      %p316 = scmp.le.s32.totalorder 1, %s21
      %p317 = scmp.lt.s32.totalorder %s21, 5
      %p318 = pnand %p316, %p317
      %p319 = pneg %p318
      // Predicated region
      $region37: #{tpu_custom_call.1} parent=5 // pred_check
        _
      $region38: #{tpu_custom_call.1} parent=5 // pred_check_branch
        %321 = sbr.rel (%p318) target = $region40
      $region39: #{tpu_custom_call.1} parent=5 // pred_region
        %s322 = ssub.s32 %s21, 1
        %s323 = sand.u32 %s48, 1
        %s324 = scalar_lea.sflag [#allocation3], %s323
        %s325 = sand.u32 %s48, 1
        %s326 = smul.addr %s325, 128
        %s327 = scalar_lea.vmem [#allocation2], %s326
        // Predicated region
        $region41: #{tpu_custom_call.1} parent=39 // pred_check
          %p328 = pneg %p61
        $region42: #{tpu_custom_call.1} parent=39 // pred_check_branch
          %330 = sbr.rel (%p328) target = $region44
        $region43: #{tpu_custom_call.1} parent=39 // pred_region
          %331 = dma.done %s324, 2048
        $region44: #{tpu_custom_call.1} parent=39 // pred_fallthru
          _
        %s332 = sand.u32 %s26, 1
        %s333 = scalar_lea.sflag [#allocation6], %s332
        %s334 = sand.u32 %s84, 1
        %s335 = smul.addr %s334, 16
        %s336 = scalar_lea.vmem [#allocation5], %s335
        // Predicated region
        $region45: #{tpu_custom_call.1} parent=39 // pred_check
          %p337 = pneg %p97
        $region46: #{tpu_custom_call.1} parent=39 // pred_check_branch
          %339 = sbr.rel (%p337) target = $region48
        $region47: #{tpu_custom_call.1} parent=39 // pred_region
          %340 = dma.done %s333, 256
        $region48: #{tpu_custom_call.1} parent=39 // pred_fallthru
          _
        %s341 = sand.u32 %s26, 1
        %s342 = scalar_lea.sflag [#allocation6], %s341
        %s343 = sand.u32 %s120, 1
        %s344 = smul.addr %s343, 16
        %s345 = scalar_lea.vmem [#allocation7], %s344
        // Predicated region
        $region49: #{tpu_custom_call.1} parent=39 // pred_check
          %p346 = pneg %p133
        $region50: #{tpu_custom_call.1} parent=39 // pred_check_branch
          %348 = sbr.rel (%p346) target = $region52
        $region51: #{tpu_custom_call.1} parent=39 // pred_region
          %349 = dma.done %s342, 256
        $region52: #{tpu_custom_call.1} parent=39 // pred_fallthru
          _
        // Predicated region
        $region53: #{tpu_custom_call.1} parent=39 // pred_check
          %p350 = pneg %p154
        $region54: #{tpu_custom_call.1} parent=39 // pred_check_branch
          %352 = sbr.rel (%p350) target = $region56
        $region55: #{tpu_custom_call.1} parent=39 // pred_region
          %353 = dma.done [#allocation9], 256
        $region56: #{tpu_custom_call.1} parent=39 // pred_fallthru
          _
        %s354 = sand.u32 %s48, 1
        %s355 = scalar_lea.sflag [#allocation3], %s354
        %s356 = sand.u32 %s48, 1
        %s357 = smul.addr %s356, 128
        %s358 = scalar_lea.vmem [#allocation2], %s357
        %p359 = pneg %p61
        %p360 = pneg %p58
        %s361 = sand.u32 %s26, 1
        %s362 = scalar_lea.sflag [#allocation6], %s361
        %s363 = sand.u32 %s84, 1
        %s364 = smul.addr %s363, 16
        %s365 = scalar_lea.vmem [#allocation5], %s364
        %p366 = pneg %p97
        %p367 = pneg %p94
        %s368 = sand.u32 %s26, 1
        %s369 = scalar_lea.sflag [#allocation6], %s368
        %s370 = sand.u32 %s120, 1
        %s371 = smul.addr %s370, 16
        %s372 = scalar_lea.vmem [#allocation7], %s371
        %p373 = pneg %p133
        %p374 = pneg %p130
        %p375 = pneg %p154
        %p376 = pneg %p151
        %p377 = pneg %p175
        %p378 = pneg %p172
        %p379 = pneg %p203
        %p380 = pneg %p200
        %s381 = sand.u32 %s190, 1
        %s382 = scalar_lea.sflag [#allocation4], %s381
        %s383 = sand.u32 %s190, 1
        %s384 = smul.addr %s383, 128
        %s385 = scalar_lea.vmem [#allocation10], %s384
        %s386 = smul.u32 8, %s31
        %s387 = smul.u32 %s31, 8
        %s388 = ssub.s32 %s387, 1
        %p389 = scmp.gt.s32.totalorder %s388, 0
        %s390 = scalar_select %p389, %s388, 0
        %s391 = smul.u32 %s31, 8
        %s392 = sadd.s32 %s391, 8
        %p393 = scmp.lt.s32.totalorder %s392, 15
        %s394 = scalar_select %p393, %s392, 15
        %s395 = smul.u32 8, %s31
        %s396 = smul.u32 %s31, 8
        %v397 = vld [vmem:[#allocation8] sm:$0xff]
        %v398 = vld [vmem:[#allocation8 + $0x8] sm:$0x1]
        %v399 = vld [vmem:[%s4] sm:$0x1]
        %v400 = vlaneseq
        %v401 = vshrl.u32 %v400, 7
        %v402 = vadd.s32 %v401, 8
        %vm403 = vcmp.ge.s32.totalorder %v401, 1
        %vm404 = vcmp.ge.s32.totalorder %v402, 1
        %vm405 = vcmp.le.s32.totalorder %v401, 14
        %vm406 = vcmp.le.s32.totalorder %v402, 14
        %p407 = scmp.gt.s32.totalorder %s396, 0
        %v408 = vld [vmem:[%s336] sm:$0xff]
        %v409 = vld [vmem:[%s336 + $0x8] sm:$0xff]
        %s410 = scalar_select %p407, 1, 0
        %v411 = vstv %s410
        %vm412 = vcmp.eq.s32.totalorder %v411, 1
        %v413 = vsel %vm412, %v408, 0.0
        %v414 = vsel %vm412, %v409, 0.0
        %s415 = sadd.s32 %s396, 8
        %p416 = scmp.lt.s32.totalorder %s415, 16
        %v417 = vld [vmem:[%s345] sm:$0xff]
        %v418 = vld [vmem:[%s345 + $0x8] sm:$0xff]
        %s419 = scalar_select %p416, 1, 0
        %v420 = vstv %s419
        %vm421 = vcmp.eq.s32.totalorder %v420, 1
        %v422 = vsel %vm421, %v417, 0.0
        %v423 = vsel %vm421, %v418, 0.0
        %v424 = vld [vmem:[%s327] sm:$0xff]
        %v425 = vld [vmem:[%s327 + $0x8] sm:$0xff]
        %s426 = scalar_lea.vmem %s327, 16 [#allocation2]
        %v427 = vld [vmem:[%s426] sm:$0xff]
        %v428 = vld [vmem:[%s426 + $0x8] sm:$0xff]
        %v429 = vlaneseq
        %v430 = vshrl.u32 %v429, 7
        %v431 = vsub.s32 4, %v430
        %v432 = vrot.slane %v397, %v431
        %v433 = vmul.f32 %v424, %v432
        %v434 = vmul.f32 %v425, %v432
        %v435 = vrot.slane %v424, 7
        %v436 = vrot.slane %v425, 7
        %vm437 = vcmp.lt.s32.totalorder %v401, 1
        %v438 = vsel %vm437, %v435, %v436
        %v439 = vsel %vm437, %v436, %v435
        %v440 = vsel %vm403, 1, 0
        %v441 = vsel %vm404, 1, 0
        %vm442 = vcmp.eq.s32.totalorder %v440, 1
        %vm443 = vcmp.eq.s32.totalorder %v441, 1
        %v444 = vsel %vm442, %v439, 0.0
        %v445 = vsel %vm443, %v438, 0.0
        %v446 = vlaneseq
        %v447 = vshrl.u32 %v446, 7
        %v448 = vsub.s32 3, %v447
        %v449 = vrot.slane %v397, %v448
        %v450 = vmul.f32 %v444, %v449
        %v451 = vmul.f32 %v445, %v449
        %v452 = vadd.f32 %v433, %v450
        %v453 = vadd.f32 %v434, %v451
        %v454 = vrot.slane %v424, 1
        %v455 = vrot.slane %v425, 1
        %vm456 = vcmp.lt.s32.totalorder %v401, 7
        %v457 = vsel %vm456, %v454, %v455
        %v458 = vsel %vm456, %v455, %v454
        %v459 = vsel %vm405, 1, 0
        %v460 = vsel %vm406, 1, 0
        %vm461 = vcmp.eq.s32.totalorder %v459, 1
        %vm462 = vcmp.eq.s32.totalorder %v460, 1
        %v463 = vsel %vm461, %v457, 0.0
        %v464 = vsel %vm462, %v458, 0.0
        %v465 = vlaneseq
        %v466 = vshrl.u32 %v465, 7
        %v467 = vsub.s32 5, %v466
        %v468 = vrot.slane %v397, %v467
        %v469 = vmul.f32 %v463, %v468
        %v470 = vmul.f32 %v464, %v468
        %v471 = vadd.f32 %v452, %v469
        %v472 = vadd.f32 %v453, %v470
        %v474 = vlaneseq
        %v475 = vshrl.u32 %v474, 7
        %v476 = vsub.s32 0, %v475
        %v477 = vrot.slane %v399, %v476
        %v479 = vadd.f32 %v477, %v471
        %v480 = vadd.f32 %v477, %v472
        %v481 = vlaneseq
        %v482 = vshrl.u32 %v481, 7
        %v483 = vsub.s32 1, %v482
        %v484 = vrot.slane %v397, %v483
        %v485 = vmul.f32 %v413, %v484
        %v486 = vmul.f32 %v414, %v484
        %v487 = vrot.slane %v413, 7
        %v488 = vrot.slane %v414, 7
        %v489 = vsel %vm437, %v487, %v488
        %v490 = vsel %vm437, %v488, %v487
        %v491 = vsel %vm442, %v490, 0.0
        %v492 = vsel %vm443, %v489, 0.0
        %v493 = vlaneseq
        %v494 = vshrl.u32 %v493, 7
        %v495 = vsub.s32 0, %v494
        %v496 = vrot.slane %v397, %v495
        %v497 = vmul.f32 %v491, %v496
        %v498 = vmul.f32 %v492, %v496
        %v499 = vadd.f32 %v485, %v497
        %v500 = vadd.f32 %v486, %v498
        %v501 = vrot.slane %v413, 1
        %v502 = vrot.slane %v414, 1
        %v503 = vsel %vm456, %v501, %v502
        %v504 = vsel %vm456, %v502, %v501
        %v505 = vsel %vm461, %v503, 0.0
        %v506 = vsel %vm462, %v504, 0.0
        %v507 = vlaneseq
        %v508 = vshrl.u32 %v507, 7
        %v509 = vsub.s32 2, %v508
        %v510 = vrot.slane %v397, %v509
        %v511 = vmul.f32 %v505, %v510
        %v512 = vmul.f32 %v506, %v510
        %v513 = vadd.f32 %v499, %v511
        %v514 = vadd.f32 %v500, %v512
        %v515 = vadd.f32 %v479, %v513
        %v516 = vadd.f32 %v480, %v514
        %v517 = vlaneseq
        %v518 = vshrl.u32 %v517, 7
        %v519 = vsub.s32 7, %v518
        %v520 = vrot.slane %v397, %v519
        %v521 = vmul.f32 %v427, %v520
        %v522 = vmul.f32 %v428, %v520
        %v523 = vrot.slane %v427, 7
        %v524 = vrot.slane %v428, 7
        %v525 = vsel %vm437, %v523, %v524
        %v526 = vsel %vm437, %v524, %v523
        %v527 = vsel %vm442, %v526, 0.0
        %v528 = vsel %vm443, %v525, 0.0
        %v529 = vlaneseq
        %v530 = vshrl.u32 %v529, 7
        %v531 = vsub.s32 6, %v530
        %v532 = vrot.slane %v397, %v531
        %v533 = vmul.f32 %v527, %v532
        %v534 = vmul.f32 %v528, %v532
        %v535 = vadd.f32 %v521, %v533
        %v536 = vadd.f32 %v522, %v534
        %v537 = vrot.slane %v427, 1
        %v538 = vrot.slane %v428, 1
        %v539 = vsel %vm456, %v537, %v538
        %v540 = vsel %vm456, %v538, %v537
        %v541 = vsel %vm461, %v539, 0.0
        %v542 = vsel %vm462, %v540, 0.0
        %v543 = vlaneseq
        %v544 = vshrl.u32 %v543, 7
        %v545 = vsub.s32 0, %v544
        %v546 = vrot.slane %v398, %v545
        %v547 = vmul.f32 %v541, %v546
        %v548 = vmul.f32 %v542, %v546
        %v549 = vadd.f32 %v535, %v547
        %v550 = vadd.f32 %v536, %v548
        %v551 = vadd.f32 %v515, %v549
        %v552 = vadd.f32 %v516, %v550
        %vm553 = vcmask 523264
        %554 = vst.msk [vmem:[%s385] sm:$0xff] %vm553, %v551
        %555 = vst.msk [vmem:[%s385 + $0x8] sm:$0xff] %vm553, %v552
        %s556 = scalar_lea.vmem %s327, 32 [#allocation2]
        %v557 = vld [vmem:[%s556] sm:$0xff]
        %v558 = vld [vmem:[%s556 + $0x8] sm:$0xff]
        %v559 = vmul.f32 %v427, %v432
        %v560 = vmul.f32 %v428, %v432
        %v561 = vmul.f32 %v527, %v449
        %v562 = vmul.f32 %v528, %v449
        %v563 = vadd.f32 %v559, %v561
        %v564 = vadd.f32 %v560, %v562
        %v565 = vmul.f32 %v541, %v468
        %v566 = vmul.f32 %v542, %v468
        %v567 = vadd.f32 %v563, %v565
        %v568 = vadd.f32 %v564, %v566
        %v569 = vadd.f32 %v477, %v567
        %v570 = vadd.f32 %v477, %v568
        %v571 = vmul.f32 %v424, %v484
        %v572 = vmul.f32 %v425, %v484
        %v573 = vmul.f32 %v444, %v496
        %v574 = vmul.f32 %v445, %v496
        %v575 = vadd.f32 %v571, %v573
        %v576 = vadd.f32 %v572, %v574
        %v577 = vmul.f32 %v463, %v510
        %v578 = vmul.f32 %v464, %v510
        %v579 = vadd.f32 %v575, %v577
        %v580 = vadd.f32 %v576, %v578
        %v581 = vadd.f32 %v569, %v579
        %v582 = vadd.f32 %v570, %v580
        %v583 = vmul.f32 %v557, %v520
        %v584 = vmul.f32 %v558, %v520
        %v585 = vrot.slane %v557, 7
        %v586 = vrot.slane %v558, 7
        %v587 = vsel %vm437, %v585, %v586
        %v588 = vsel %vm437, %v586, %v585
        %v589 = vsel %vm442, %v588, 0.0
        %v590 = vsel %vm443, %v587, 0.0
        %v591 = vmul.f32 %v589, %v532
        %v592 = vmul.f32 %v590, %v532
        %v593 = vadd.f32 %v583, %v591
        %v594 = vadd.f32 %v584, %v592
        %v595 = vrot.slane %v557, 1
        %v596 = vrot.slane %v558, 1
        %v597 = vsel %vm456, %v595, %v596
        %v598 = vsel %vm456, %v596, %v595
        %v599 = vsel %vm461, %v597, 0.0
        %v600 = vsel %vm462, %v598, 0.0
        %v601 = vmul.f32 %v599, %v546
        %v602 = vmul.f32 %v600, %v546
        %v603 = vadd.f32 %v593, %v601
        %v604 = vadd.f32 %v594, %v602
        %v605 = vadd.f32 %v581, %v603
        %v606 = vadd.f32 %v582, %v604
        %s607 = scalar_lea.vmem %s385, 16 [#allocation10]
        %608 = vst.msk [vmem:[%s607] sm:$0xff] %vm553, %v605
        %609 = vst.msk [vmem:[%s607 + $0x8] sm:$0xff] %vm553, %v606
        %s610 = scalar_lea.vmem %s327, 48 [#allocation2]
        %v611 = vld [vmem:[%s610] sm:$0xff]
        %v612 = vld [vmem:[%s610 + $0x8] sm:$0xff]
        %v613 = vmul.f32 %v557, %v432
        %v614 = vmul.f32 %v558, %v432
        %v615 = vmul.f32 %v589, %v449
        %v616 = vmul.f32 %v590, %v449
        %v617 = vadd.f32 %v613, %v615
        %v618 = vadd.f32 %v614, %v616
        %v619 = vmul.f32 %v599, %v468
        %v620 = vmul.f32 %v600, %v468
        %v621 = vadd.f32 %v617, %v619
        %v622 = vadd.f32 %v618, %v620
        %v623 = vadd.f32 %v477, %v621
        %v624 = vadd.f32 %v477, %v622
        %v625 = vmul.f32 %v427, %v484
        %v626 = vmul.f32 %v428, %v484
        %v627 = vmul.f32 %v527, %v496
        %v628 = vmul.f32 %v528, %v496
        %v629 = vadd.f32 %v625, %v627
        %v630 = vadd.f32 %v626, %v628
        %v631 = vmul.f32 %v541, %v510
        %v632 = vmul.f32 %v542, %v510
        %v633 = vadd.f32 %v629, %v631
        %v634 = vadd.f32 %v630, %v632
        %v635 = vadd.f32 %v623, %v633
        %v636 = vadd.f32 %v624, %v634
        %v637 = vmul.f32 %v611, %v520
        %v638 = vmul.f32 %v612, %v520
        %v639 = vrot.slane %v611, 7
        %v640 = vrot.slane %v612, 7
        %v641 = vsel %vm437, %v639, %v640
        %v642 = vsel %vm437, %v640, %v639
        %v643 = vsel %vm442, %v642, 0.0
        %v644 = vsel %vm443, %v641, 0.0
        %v645 = vmul.f32 %v643, %v532
        %v646 = vmul.f32 %v644, %v532
        %v647 = vadd.f32 %v637, %v645
        %v648 = vadd.f32 %v638, %v646
        %v649 = vrot.slane %v611, 1
        %v650 = vrot.slane %v612, 1
        %v651 = vsel %vm456, %v649, %v650
        %v652 = vsel %vm456, %v650, %v649
        %v653 = vsel %vm461, %v651, 0.0
        %v654 = vsel %vm462, %v652, 0.0
        %v655 = vmul.f32 %v653, %v546
        %v656 = vmul.f32 %v654, %v546
        %v657 = vadd.f32 %v647, %v655
        %v658 = vadd.f32 %v648, %v656
        %v659 = vadd.f32 %v635, %v657
        %v660 = vadd.f32 %v636, %v658
        %s661 = scalar_lea.vmem %s385, 32 [#allocation10]
        %662 = vst.msk [vmem:[%s661] sm:$0xff] %vm553, %v659
        %663 = vst.msk [vmem:[%s661 + $0x8] sm:$0xff] %vm553, %v660
        %s664 = scalar_lea.vmem %s327, 64 [#allocation2]
        %v665 = vld [vmem:[%s664] sm:$0xff]
        %v666 = vld [vmem:[%s664 + $0x8] sm:$0xff]
        %v667 = vmul.f32 %v611, %v432
        %v668 = vmul.f32 %v612, %v432
        %v669 = vmul.f32 %v643, %v449
        %v670 = vmul.f32 %v644, %v449
        %v671 = vadd.f32 %v667, %v669
        %v672 = vadd.f32 %v668, %v670
        %v673 = vmul.f32 %v653, %v468
        %v674 = vmul.f32 %v654, %v468
        %v675 = vadd.f32 %v671, %v673
        %v676 = vadd.f32 %v672, %v674
        %v677 = vadd.f32 %v477, %v675
        %v678 = vadd.f32 %v477, %v676
        %v679 = vmul.f32 %v557, %v484
        %v680 = vmul.f32 %v558, %v484
        %v681 = vmul.f32 %v589, %v496
        %v682 = vmul.f32 %v590, %v496
        %v683 = vadd.f32 %v679, %v681
        %v684 = vadd.f32 %v680, %v682
        %v685 = vmul.f32 %v599, %v510
        %v686 = vmul.f32 %v600, %v510
        %v687 = vadd.f32 %v683, %v685
        %v688 = vadd.f32 %v684, %v686
        %v689 = vadd.f32 %v677, %v687
        %v690 = vadd.f32 %v678, %v688
        %v691 = vmul.f32 %v665, %v520
        %v692 = vmul.f32 %v666, %v520
        %v693 = vrot.slane %v665, 7
        %v694 = vrot.slane %v666, 7
        %v695 = vsel %vm437, %v693, %v694
        %v696 = vsel %vm437, %v694, %v693
        %v697 = vsel %vm442, %v696, 0.0
        %v698 = vsel %vm443, %v695, 0.0
        %v699 = vmul.f32 %v697, %v532
        %v700 = vmul.f32 %v698, %v532
        %v701 = vadd.f32 %v691, %v699
        %v702 = vadd.f32 %v692, %v700
        %v703 = vrot.slane %v665, 1
        %v704 = vrot.slane %v666, 1
        %v705 = vsel %vm456, %v703, %v704
        %v706 = vsel %vm456, %v704, %v703
        %v707 = vsel %vm461, %v705, 0.0
        %v708 = vsel %vm462, %v706, 0.0
        %v709 = vmul.f32 %v707, %v546
        %v710 = vmul.f32 %v708, %v546
        %v711 = vadd.f32 %v701, %v709
        %v712 = vadd.f32 %v702, %v710
        %v713 = vadd.f32 %v689, %v711
        %v714 = vadd.f32 %v690, %v712
        %s715 = scalar_lea.vmem %s385, 48 [#allocation10]
        %716 = vst.msk [vmem:[%s715] sm:$0xff] %vm553, %v713
        %717 = vst.msk [vmem:[%s715 + $0x8] sm:$0xff] %vm553, %v714
        %s718 = scalar_lea.vmem %s327, 80 [#allocation2]
        %v719 = vld [vmem:[%s718] sm:$0xff]
        %v720 = vld [vmem:[%s718 + $0x8] sm:$0xff]
        %v721 = vmul.f32 %v665, %v432
        %v722 = vmul.f32 %v666, %v432
        %v723 = vmul.f32 %v697, %v449
        %v724 = vmul.f32 %v698, %v449
        %v725 = vadd.f32 %v721, %v723
        %v726 = vadd.f32 %v722, %v724
        %v727 = vmul.f32 %v707, %v468
        %v728 = vmul.f32 %v708, %v468
        %v729 = vadd.f32 %v725, %v727
        %v730 = vadd.f32 %v726, %v728
        %v731 = vadd.f32 %v477, %v729
        %v732 = vadd.f32 %v477, %v730
        %v733 = vmul.f32 %v611, %v484
        %v734 = vmul.f32 %v612, %v484
        %v735 = vmul.f32 %v643, %v496
        %v736 = vmul.f32 %v644, %v496
        %v737 = vadd.f32 %v733, %v735
        %v738 = vadd.f32 %v734, %v736
        %v739 = vmul.f32 %v653, %v510
        %v740 = vmul.f32 %v654, %v510
        %v741 = vadd.f32 %v737, %v739
        %v742 = vadd.f32 %v738, %v740
        %v743 = vadd.f32 %v731, %v741
        %v744 = vadd.f32 %v732, %v742
        %v745 = vmul.f32 %v719, %v520
        %v746 = vmul.f32 %v720, %v520
        %v747 = vrot.slane %v719, 7
        %v748 = vrot.slane %v720, 7
        %v749 = vsel %vm437, %v747, %v748
        %v750 = vsel %vm437, %v748, %v747
        %v751 = vsel %vm442, %v750, 0.0
        %v752 = vsel %vm443, %v749, 0.0
        %v753 = vmul.f32 %v751, %v532
        %v754 = vmul.f32 %v752, %v532
        %v755 = vadd.f32 %v745, %v753
        %v756 = vadd.f32 %v746, %v754
        %v757 = vrot.slane %v719, 1
        %v758 = vrot.slane %v720, 1
        %v759 = vsel %vm456, %v757, %v758
        %v760 = vsel %vm456, %v758, %v757
        %v761 = vsel %vm461, %v759, 0.0
        %v762 = vsel %vm462, %v760, 0.0
        %v763 = vmul.f32 %v761, %v546
        %v764 = vmul.f32 %v762, %v546
        %v765 = vadd.f32 %v755, %v763
        %v766 = vadd.f32 %v756, %v764
        %v767 = vadd.f32 %v743, %v765
        %v768 = vadd.f32 %v744, %v766
        %s769 = scalar_lea.vmem %s385, 64 [#allocation10]
        %770 = vst.msk [vmem:[%s769] sm:$0xff] %vm553, %v767
        %771 = vst.msk [vmem:[%s769 + $0x8] sm:$0xff] %vm553, %v768
        %s772 = scalar_lea.vmem %s327, 96 [#allocation2]
        %v773 = vld [vmem:[%s772] sm:$0xff]
        %v774 = vld [vmem:[%s772 + $0x8] sm:$0xff]
        %v775 = vmul.f32 %v719, %v432
        %v776 = vmul.f32 %v720, %v432
        %v777 = vmul.f32 %v751, %v449
        %v778 = vmul.f32 %v752, %v449
        %v779 = vadd.f32 %v775, %v777
        %v780 = vadd.f32 %v776, %v778
        %v781 = vmul.f32 %v761, %v468
        %v782 = vmul.f32 %v762, %v468
        %v783 = vadd.f32 %v779, %v781
        %v784 = vadd.f32 %v780, %v782
        %v785 = vadd.f32 %v477, %v783
        %v786 = vadd.f32 %v477, %v784
        %v787 = vmul.f32 %v665, %v484
        %v788 = vmul.f32 %v666, %v484
        %v789 = vmul.f32 %v697, %v496
        %v790 = vmul.f32 %v698, %v496
        %v791 = vadd.f32 %v787, %v789
        %v792 = vadd.f32 %v788, %v790
        %v793 = vmul.f32 %v707, %v510
        %v794 = vmul.f32 %v708, %v510
        %v795 = vadd.f32 %v791, %v793
        %v796 = vadd.f32 %v792, %v794
        %v797 = vadd.f32 %v785, %v795
        %v798 = vadd.f32 %v786, %v796
        %v799 = vmul.f32 %v773, %v520
        %v800 = vmul.f32 %v774, %v520
        %v801 = vrot.slane %v773, 7
        %v802 = vrot.slane %v774, 7
        %v803 = vsel %vm437, %v801, %v802
        %v804 = vsel %vm437, %v802, %v801
        %v805 = vsel %vm442, %v804, 0.0
        %v806 = vsel %vm443, %v803, 0.0
        %v807 = vmul.f32 %v805, %v532
        %v808 = vmul.f32 %v806, %v532
        %v809 = vadd.f32 %v799, %v807
        %v810 = vadd.f32 %v800, %v808
        %v811 = vrot.slane %v773, 1
        %v812 = vrot.slane %v774, 1
        %v813 = vsel %vm456, %v811, %v812
        %v814 = vsel %vm456, %v812, %v811
        %v815 = vsel %vm461, %v813, 0.0
        %v816 = vsel %vm462, %v814, 0.0
        %v817 = vmul.f32 %v815, %v546
        %v818 = vmul.f32 %v816, %v546
        %v819 = vadd.f32 %v809, %v817
        %v820 = vadd.f32 %v810, %v818
        %v821 = vadd.f32 %v797, %v819
        %v822 = vadd.f32 %v798, %v820
        %s823 = scalar_lea.vmem %s385, 80 [#allocation10]
        %824 = vst.msk [vmem:[%s823] sm:$0xff] %vm553, %v821
        %825 = vst.msk [vmem:[%s823 + $0x8] sm:$0xff] %vm553, %v822
        %s826 = scalar_lea.vmem %s327, 112 [#allocation2]
        %v827 = vld [vmem:[%s826] sm:$0xff]
        %v828 = vld [vmem:[%s826 + $0x8] sm:$0xff]
        %v829 = vmul.f32 %v773, %v432
        %v830 = vmul.f32 %v774, %v432
        %v831 = vmul.f32 %v805, %v449
        %v832 = vmul.f32 %v806, %v449
        %v833 = vadd.f32 %v829, %v831
        %v834 = vadd.f32 %v830, %v832
        %v835 = vmul.f32 %v815, %v468
        %v836 = vmul.f32 %v816, %v468
        %v837 = vadd.f32 %v833, %v835
        %v838 = vadd.f32 %v834, %v836
        %v839 = vadd.f32 %v477, %v837
        %v840 = vadd.f32 %v477, %v838
        %v841 = vmul.f32 %v719, %v484
        %v842 = vmul.f32 %v720, %v484
        %v843 = vmul.f32 %v751, %v496
        %v844 = vmul.f32 %v752, %v496
        %v845 = vadd.f32 %v841, %v843
        %v846 = vadd.f32 %v842, %v844
        %v847 = vmul.f32 %v761, %v510
        %v848 = vmul.f32 %v762, %v510
        %v849 = vadd.f32 %v845, %v847
        %v850 = vadd.f32 %v846, %v848
        %v851 = vadd.f32 %v839, %v849
        %v852 = vadd.f32 %v840, %v850
        %v853 = vmul.f32 %v827, %v520
        %v854 = vmul.f32 %v828, %v520
        %v855 = vrot.slane %v827, 7
        %v856 = vrot.slane %v828, 7
        %v857 = vsel %vm437, %v855, %v856
        %v858 = vsel %vm437, %v856, %v855
        %v859 = vsel %vm442, %v858, 0.0
        %v860 = vsel %vm443, %v857, 0.0
        %v861 = vmul.f32 %v859, %v532
        %v862 = vmul.f32 %v860, %v532
        %v863 = vadd.f32 %v853, %v861
        %v864 = vadd.f32 %v854, %v862
        %v865 = vrot.slane %v827, 1
        %v866 = vrot.slane %v828, 1
        %v867 = vsel %vm456, %v865, %v866
        %v868 = vsel %vm456, %v866, %v865
        %v869 = vsel %vm461, %v867, 0.0
        %v870 = vsel %vm462, %v868, 0.0
        %v871 = vmul.f32 %v869, %v546
        %v872 = vmul.f32 %v870, %v546
        %v873 = vadd.f32 %v863, %v871
        %v874 = vadd.f32 %v864, %v872
        %v875 = vadd.f32 %v851, %v873
        %v876 = vadd.f32 %v852, %v874
        %s877 = scalar_lea.vmem %s385, 96 [#allocation10]
        %878 = vst.msk [vmem:[%s877] sm:$0xff] %vm553, %v875
        %879 = vst.msk [vmem:[%s877 + $0x8] sm:$0xff] %vm553, %v876
        %v880 = vmul.f32 %v827, %v432
        %v881 = vmul.f32 %v828, %v432
        %v882 = vmul.f32 %v859, %v449
        %v883 = vmul.f32 %v860, %v449
        %v884 = vadd.f32 %v880, %v882
        %v885 = vadd.f32 %v881, %v883
        %v886 = vmul.f32 %v869, %v468
        %v887 = vmul.f32 %v870, %v468
        %v888 = vadd.f32 %v884, %v886
        %v889 = vadd.f32 %v885, %v887
        %v890 = vadd.f32 %v477, %v888
        %v891 = vadd.f32 %v477, %v889
        %v892 = vmul.f32 %v773, %v484
        %v893 = vmul.f32 %v774, %v484
        %v894 = vmul.f32 %v805, %v496
        %v895 = vmul.f32 %v806, %v496
        %v896 = vadd.f32 %v892, %v894
        %v897 = vadd.f32 %v893, %v895
        %v898 = vmul.f32 %v815, %v510
        %v899 = vmul.f32 %v816, %v510
        %v900 = vadd.f32 %v896, %v898
        %v901 = vadd.f32 %v897, %v899
        %v902 = vadd.f32 %v890, %v900
        %v903 = vadd.f32 %v891, %v901
        %v904 = vmul.f32 %v422, %v520
        %v905 = vmul.f32 %v423, %v520
        %v906 = vrot.slane %v422, 7
        %v907 = vrot.slane %v423, 7
        %v908 = vsel %vm437, %v906, %v907
        %v909 = vsel %vm437, %v907, %v906
        %v910 = vsel %vm442, %v909, 0.0
        %v911 = vsel %vm443, %v908, 0.0
        %v912 = vmul.f32 %v910, %v532
        %v913 = vmul.f32 %v911, %v532
        %v914 = vadd.f32 %v904, %v912
        %v915 = vadd.f32 %v905, %v913
        %v916 = vrot.slane %v422, 1
        %v917 = vrot.slane %v423, 1
        %v918 = vsel %vm456, %v916, %v917
        %v919 = vsel %vm456, %v917, %v916
        %v920 = vsel %vm461, %v918, 0.0
        %v921 = vsel %vm462, %v919, 0.0
        %v922 = vmul.f32 %v920, %v546
        %v923 = vmul.f32 %v921, %v546
        %v924 = vadd.f32 %v914, %v922
        %v925 = vadd.f32 %v915, %v923
        %v926 = vadd.f32 %v902, %v924
        %v927 = vadd.f32 %v903, %v925
        %s928 = scalar_lea.vmem %s385, 112 [#allocation10]
        %929 = vst.msk [vmem:[%s928] sm:$0xff] %vm553, %v926
        %930 = vst.msk [vmem:[%s928 + $0x8] sm:$0xff] %vm553, %v927
        %s931 = sand.u32 %s190, 1
        %s932 = scalar_lea.sflag [#allocation4], %s931
        %s933 = sand.u32 %s190, 1
        %s934 = smul.addr %s933, 128
        %s935 = scalar_lea.vmem [#allocation10], %s934
        // Predicated region
        $region57: #{tpu_custom_call.1} parent=39 // pred_check
          %p936 = pneg %p200
        $region58: #{tpu_custom_call.1} parent=39 // pred_check_branch
          %938 = sbr.rel (%p936) target = $region60
        $region59: #{tpu_custom_call.1} parent=39 // pred_region
          %s939 = smul.u32 8, %s31
          %s941 = ssub.s32 2048, 2048
          %942 = vsyncadd %s932, %s941
          %s943 = smul.addr %s939, 2
          %s944 = smul.addr %s30, 32
          %s945 = sadd.s32 %s943, %s944
          %s946 = smul.addr %s945, 128
          %s947 = scalar_lea.hbm %s5, %s946
          %s948 = sshll.u32 %s935, 4
          %s949 = int_to_ptr.vmem [resolvable:$true] %s948
          %954 = dma.vmem_to_hbm [thread:$0]  %s949, 2048, %s947, %s932, 128, 128, 8
        $region60: #{tpu_custom_call.1} parent=39 // pred_fallthru
          _
      $region40: #{tpu_custom_call.1} parent=5 // pred_fallthru
        _
      %p955 = scmp.le.s32.totalorder 2, %s21
      // Predicated region
      $region61: #{tpu_custom_call.1} parent=5 // pred_check
        %p956 = pneg %p955
      $region62: #{tpu_custom_call.1} parent=5 // pred_check_branch
        %958 = sbr.rel (%p956) target = $region64
      $region63: #{tpu_custom_call.1} parent=5 // pred_region
        %s959 = ssub.s32 %s21, 2
        // Predicated region
        $region65: #{tpu_custom_call.1} parent=63 // pred_check
          %p960 = pneg %p206
        $region66: #{tpu_custom_call.1} parent=63 // pred_check_branch
          %962 = sbr.rel (%p960) target = $region68
        $region67: #{tpu_custom_call.1} parent=63 // pred_region
          %s963 = sand.u32 %s191, 1
          %s964 = scalar_lea.sflag [#allocation4], %s963
          %s965 = sand.u32 %s191, 1
          %s966 = smul.addr %s965, 128
          %s967 = scalar_lea.vmem [#allocation10], %s966
          %968 = dma.done %s964, 2048
        $region68: #{tpu_custom_call.1} parent=63 // pred_fallthru
          _
      $region64: #{tpu_custom_call.1} parent=5 // pred_fallthru
        _
    $region6: #{tpu_custom_call.1} parent=1 // loop_footer
      %s25 = sadd.s32 1, %s21
    $region7: #{tpu_custom_call.1} parent=1 // loop_footer_branch
      %20 = sbr.rel target = $region3
    $region8: #{tpu_custom_call.1} parent=1 // loop_exit
      _
    %969 = vsyncpa [#allocation3], 1
    %s970 = scalar_lea.sflag [#allocation3], 1
    %971 = vsyncpa %s970, 1
    %972 = vsyncpa [#allocation6], 1
    %s973 = scalar_lea.sflag [#allocation6], 1
    %974 = vsyncpa %s973, 1
    %975 = vsyncpa [#allocation9], 1
    %976 = vsyncpa [#allocation4], 1
    %s977 = scalar_lea.sflag [#allocation4], 1
    %978 = vsyncpa %s977, 1

</llo_original>
